<compile_context>
chip_gen: v7x
topology: tpu7x:2x2x1
jax: 0.10.0
libtpu: 0.0.40
codegen_flags: <defaults>
</compile_context>

<pallas_src>
import jax
import jax.numpy as jnp
from jax.experimental import pallas as pl
from jax.experimental.pallas import tpu as pltpu


# --------------------------------------------------------------------------
# Kernel
# --------------------------------------------------------------------------
def _color_net_kernel(x_ref,
                      w01_ref, eb0_ref, ew1_ref, eb1_ref, ew2_ref, eb2_ref,
                      dw0a_ref, db0_ref, dw1_ref, db1_ref, dw2_ref, db2_ref,
                      out_ref):
    bf = jnp.bfloat16
    x = x_ref[...]                            # bf16 [TM, Kpad] (cat([inp,inpf,inf]) zero-padded)

    def lin(a, w_ref, b_ref, relu):
        y = jnp.dot(a.astype(bf), w_ref[...],
                    preferred_element_type=jnp.float32) + b_ref[...]
        return jnp.maximum(y, 0.0) if relu else y

    h_enc = eb0_ref.shape[-1]

    # One merged MXU dot feeds both consumers of x:
    #   lanes [0:h_enc)        -> encoder layer-0 pre-activation
    #   lanes [h_enc:h_enc+h0) -> decoder layer-0 partial (x_cat @ dw0b, with
    #                             zero rows for the inp/inpf/pad columns)
    y01 = jnp.dot(x, w01_ref[...], preferred_element_type=jnp.float32)
    h = jnp.maximum(y01[:, :h_enc] + eb0_ref[...], 0.0)   # encoder layer 0
    dec_part = y01[:, h_enc:]                              # decoder layer-0 partial

    # encoder tail: h_enc -> 64 -> fin   (inter_weight pre-folded into w01)
    h = lin(h, ew1_ref, eb1_ref, True)
    oute = lin(h, ew2_ref, eb2_ref, False)

    # decoder layer 0: relu(cat([oute, inf]) @ dw0 + db0)
    #   == relu(oute @ dw0a + dec_part + db0)   (concat eliminated)
    y0 = (jnp.dot(oute.astype(bf), dw0a_ref[...],
                  preferred_element_type=jnp.float32)
          + dec_part + db0_ref[...])
    h = jnp.maximum(y0, 0.0)

    # decoder tail: 64 -> 64 -> fin (final layer zero-padded to 128 lanes so
    # the store is lane-dense; padding sliced off in the wrapper)
    h = lin(h, dw1_ref, db1_ref, True)
    outd = lin(h, dw2_ref, db2_ref, False)

    out_ref[...] = outd.astype(out_ref.dtype)


# --------------------------------------------------------------------------
# Wrapper
# --------------------------------------------------------------------------
def _round_up(x, m):
    return (x + m - 1) // m * m


def color_net_forward(inp, inf, inpf, params, inter_weight=1.0, tile_m=2048):
    """Mirrors Color_net.forward(inp, inf, inpf, inter_weight=...)."""
    p_num = inf.shape[0]
    inf2d = inf.reshape(p_num, -1)                   # inf.reshape([p_num, -1])
    fin_dim = inf2d.shape[1]
    pin_dim = inp.shape[1]
    pfin_dim = inpf.shape[1]

    (ew0, eb0), (ew1, eb1), (ew2, eb2) = params["enc"]
    (dw0, db0), (dw1, db1), (dw2, db2) = params["dec"]
    h_enc = ew0.shape[1]
    h0 = dw0.shape[1]

    bf = jnp.bfloat16

    # ---------- lane-aligned dims ----------
    k_cat = pin_dim + pfin_dim + fin_dim
    k_pad = _round_up(k_cat, 128)                    # aligned contraction dim
    out_pad = _round_up(fin_dim, 128)                # lane-dense output store

    # ---------- tile / grid ----------
    # Keep the grid at >= 2 steps whenever p_num allows it so the single
    # "parallel" axis can be sharded across both TensorCores on v7x.
    n128 = _round_up(p_num, 128)
    if n128 >= 256:
        tile = min(tile_m, max(128, (n128 // 2) // 128 * 128))
    else:
        tile = n128
    n_pad = _round_up(p_num, tile)
    grid = (n_pad // tile,)

    # ---------- one-time XLA-side weight prep (hoisted out of the kernel) ----
    # fold inter_weight into the inpf rows of ew0 (one-time small scale)
    iw = jnp.asarray(inter_weight, jnp.float32)
    ew0_s = ew0.at[pin_dim:pin_dim + pfin_dim, :].multiply(iw)
    ew0_p = jnp.zeros((k_pad, h_enc), jnp.float32).at[:k_cat].set(ew0_s)

    # split decoder layer-0 weight:  cat([oute, inf]) @ dw0
    #   == oute @ dw0[:fin]  +  x_cat_padded @ dw0b_full
    dw0a = dw0[:fin_dim]
    dw0b_full = jnp.zeros((k_pad, h0), jnp.float32).at[
        pin_dim + pfin_dim:k_cat].set(dw0[fin_dim:])

    # merge the two weights that multiply x into one [k_pad, h_enc+h0] operand
    w01 = jnp.concatenate([ew0_p, dw0b_full], axis=1).astype(bf)

    # final layer padded to a lane-dense 128-wide output
    dw2_p = jnp.zeros((dw2.shape[0], out_pad), jnp.float32
                      ).at[:, :fin_dim].set(dw2).astype(bf)
    db2_p = jnp.zeros((1, out_pad), jnp.float32).at[:, :fin_dim].set(db2)

    ew1_b, ew2_b = ew1.astype(bf), ew2.astype(bf)
    dw0a_b, dw1_b = dw0a.astype(bf), dw1.astype(bf)

    # ---------- input slab: single bf16 fusion (no intermediate f32 slab) ----
    x_cat = jnp.concatenate(
        [inp.astype(bf), inpf.astype(bf), inf2d.astype(bf)], axis=1)
    x_full = jnp.pad(x_cat, ((0, n_pad - p_num), (0, k_pad - k_cat)))

    def row_spec(d):
        return pl.BlockSpec((tile, d), lambda i: (i, 0))

    def full_spec(a):
        return pl.BlockSpec(a.shape, lambda i: (0,) * a.ndim)

    # advisory cost estimate for XLA's scheduler
    flops = 2 * n_pad * (k_pad * (h_enc + h0)
                         + h_enc * ew1.shape[1] + ew1.shape[1] * fin_dim
                         + fin_dim * h0
                         + h0 * dw1.shape[1] + dw1.shape[1] * out_pad)
    weight_bytes = (2 * (w01.size + ew1_b.size + ew2_b.size
                         + dw0a_b.size + dw1_b.size + dw2_p.size)
                    + 4 * (eb0.size + eb1.size + eb2.size
                           + db0.size + db1.size + db2_p.size))
    bytes_accessed = n_pad * (k_pad * 2 + out_pad * 2) + weight_bytes

    outd = pl.pallas_call(
        _color_net_kernel,
        out_shape=jax.ShapeDtypeStruct((n_pad, out_pad), jnp.bfloat16),
        grid=grid,
        in_specs=[row_spec(k_pad),
                  full_spec(w01), full_spec(eb0),
                  full_spec(ew1_b), full_spec(eb1),
                  full_spec(ew2_b), full_spec(eb2),
                  full_spec(dw0a_b), full_spec(db0),
                  full_spec(dw1_b), full_spec(db1),
                  full_spec(dw2_p), full_spec(db2_p)],
        out_specs=row_spec(out_pad),
        compiler_params=pltpu.CompilerParams(
            dimension_semantics=("parallel",),
            vmem_limit_bytes=32 * 1024 * 1024),
        cost_estimate=pl.CostEstimate(
            flops=int(flops), transcendentals=0,
            bytes_accessed=int(bytes_accessed)),
    )(x_full, w01, eb0, ew1_b, eb1, ew2_b, eb2,
      dw0a_b, db0, dw1_b, db1, dw2_p, db2_p)

    # return outd.reshape([p_num, -1, 3])
    return outd[:p_num, :fin_dim].astype(jnp.float32).reshape(p_num, -1, 3)


# --------------------------------------------------------------------------
# Deterministic parameter construction (synthetic, xavier-uniform)
# --------------------------------------------------------------------------
def _make_mlp_params(key, dims):
    """dims = [in, h0, h1, ..., out]; weights stored as [in, out]."""
    layers = []
    for i in range(len(dims) - 1):
        key, kw, kb = jax.random.split(key, 3)
        fan_in, fan_out = dims[i], dims[i + 1]
        limit = (6.0 / (fan_in + fan_out)) ** 0.5
        w = jax.random.uniform(kw, (fan_in, fan_out), jnp.float32, -limit, limit)
        b = jax.random.uniform(kb, (1, fan_out), jnp.float32,
                               -1.0 / fan_in ** 0.5, 1.0 / fan_in ** 0.5)
        layers.append((w, b))
    return layers, key


def make_color_net_params(key, fin_dim, pin_dim, pfin_dim, en_dims, de_dims):
    # encoder input columns are ordered [inp(pin), inpf(pfin), inf(fin)]
    enc, key = _make_mlp_params(key, [pin_dim + pfin_dim + fin_dim] + en_dims + [fin_dim])
    dec, key = _make_mlp_params(key, [fin_dim * 2] + de_dims + [fin_dim])
    # TODO(synk): color_decoder branch (pre_compc=True), positional encodings
    # (use_pencoding), dropout, store_cache / forward_cache are not exercised
    # in the default forward path and are not implemented here.
    return {"enc": enc, "dec": dec}


# --------------------------------------------------------------------------
# Pure-JAX f32 reference (for correctness check)
# --------------------------------------------------------------------------
def color_net_reference(inp, inf, inpf, params, inter_weight=1.0):
    p_num = inf.shape[0]
    inf2d = inf.reshape(p_num, -1)
    x = jnp.concatenate([inp, inpf * inter_weight, inf2d], axis=1)

    def mlp(x, layers):
        n = len(layers)
        for i, (w, b) in enumerate(layers):
            x = x @ w + b
            if i != n - 1:
                x = jnp.maximum(x, 0.0)
        return x

    oute = mlp(x, params["enc"])
    outd = mlp(jnp.concatenate([oute, inf2d], axis=1), params["dec"])
    return outd.reshape(p_num, -1, 3)


# --------------------------------------------------------------------------
if __name__ == "__main__":
    # Small shapes consistent with the module: fin_dim divisible by 3
    # (SH-style color features); p_num NOT a multiple of the tile to exercise
    # the padding path and force a 2-step grid.
    p_num, fin_dim, pin_dim, pfin_dim = 200, 48, 3, 32
    en_dims, de_dims = [64, 64], [64, 64]

    key = jax.random.PRNGKey(0)
    key, k1, k2, k3 = jax.random.split(key, 4)
    inp = jax.random.normal(k1, (p_num, pin_dim), jnp.float32)          # positions
    inf = jax.random.normal(k2, (p_num, fin_dim // 3, 3), jnp.float32)  # point color feats
    inpf = jax.random.normal(k3, (p_num, pfin_dim), jnp.float32)        # extra point feats

    params = make_color_net_params(key, fin_dim, pin_dim, pfin_dim, en_dims, de_dims)

    out = color_net_forward(inp, inf, inpf, params, inter_weight=0.7)
    out = jax.block_until_ready(out)
    assert out.shape == (p_num, fin_dim // 3, 3)

    ref = color_net_reference(inp, inf, inpf, params, inter_weight=0.7)
    # Loose-ish tolerance: kernel matmuls run in bf16 (f32 accumulation) and
    # the output is stored in bf16; reference is pure f32.
    rel = jnp.linalg.norm(out - ref) / jnp.linalg.norm(ref)
    max_abs = jnp.max(jnp.abs(out - ref))
    assert rel < 3e-2 and max_abs < 2e-1, (float(rel), float(max_abs))

    print("KERNEL_OK")
</pallas_src>

<mosaic_0001>
module attributes {stable_mosaic.version = 11 : i64} {
  func.func @_color_net_kernel(%arg0: i32, %arg1: memref<128x128xbf16, #tpu.memory_space<vmem>>, %arg2: memref<128x128xbf16, #tpu.memory_space<vmem>>, %arg3: memref<1x64xf32, #tpu.memory_space<vmem>>, %arg4: memref<64x64xbf16, #tpu.memory_space<vmem>>, %arg5: memref<1x64xf32, #tpu.memory_space<vmem>>, %arg6: memref<64x48xbf16, #tpu.memory_space<vmem>>, %arg7: memref<1x48xf32, #tpu.memory_space<vmem>>, %arg8: memref<48x64xbf16, #tpu.memory_space<vmem>>, %arg9: memref<1x64xf32, #tpu.memory_space<vmem>>, %arg10: memref<64x64xbf16, #tpu.memory_space<vmem>>, %arg11: memref<1x64xf32, #tpu.memory_space<vmem>>, %arg12: memref<64x128xbf16, #tpu.memory_space<vmem>>, %arg13: memref<1x128xf32, #tpu.memory_space<vmem>>, %arg14: memref<128x128xbf16, #tpu.memory_space<vmem>>) attributes {dimension_semantics = [#tpu.dimension_semantics<parallel>], iteration_bounds = array<i64: 2>, scalar_prefetch = 0 : i64, scratch_operands = 0 : i64, tpu.core_type = #tpu.core_type<tc>, window_params = [{transform_indices = @transform_0, window_bounds = array<i64: 128, 128>}, {pipeline_mode = #tpu.pipeline_mode<synchronous>, transform_indices = @transform_1, window_bounds = array<i64: 128, 128>}, {pipeline_mode = #tpu.pipeline_mode<synchronous>, transform_indices = @transform_2, window_bounds = array<i64: 1, 64>}, {pipeline_mode = #tpu.pipeline_mode<synchronous>, transform_indices = @transform_3, window_bounds = array<i64: 64, 64>}, {pipeline_mode = #tpu.pipeline_mode<synchronous>, transform_indices = @transform_4, window_bounds = array<i64: 1, 64>}, {pipeline_mode = #tpu.pipeline_mode<synchronous>, transform_indices = @transform_5, window_bounds = array<i64: 64, 48>}, {pipeline_mode = #tpu.pipeline_mode<synchronous>, transform_indices = @transform_6, window_bounds = array<i64: 1, 48>}, {pipeline_mode = #tpu.pipeline_mode<synchronous>, transform_indices = @transform_7, window_bounds = array<i64: 48, 64>}, {pipeline_mode = #tpu.pipeline_mode<synchronous>, transform_indices = @transform_8, window_bounds = array<i64: 1, 64>}, {pipeline_mode = #tpu.pipeline_mode<synchronous>, transform_indices = @transform_9, window_bounds = array<i64: 64, 64>}, {pipeline_mode = #tpu.pipeline_mode<synchronous>, transform_indices = @transform_10, window_bounds = array<i64: 1, 64>}, {pipeline_mode = #tpu.pipeline_mode<synchronous>, transform_indices = @transform_11, window_bounds = array<i64: 64, 128>}, {pipeline_mode = #tpu.pipeline_mode<synchronous>, transform_indices = @transform_12, window_bounds = array<i64: 1, 128>}, {transform_indices = @transform_13, window_bounds = array<i64: 128, 128>}]} {
    %c0 = arith.constant 0 : index
    %c0_0 = arith.constant 0 : index
    %0 = vector.load %arg1[%c0, %c0_0] : memref<128x128xbf16, #tpu.memory_space<vmem>>, vector<128x128xbf16>
    %c0_1 = arith.constant 0 : index
    %c0_2 = arith.constant 0 : index
    %1 = vector.load %arg2[%c0_1, %c0_2] : memref<128x128xbf16, #tpu.memory_space<vmem>>, vector<128x128xbf16>
    %cst = arith.constant dense<0.000000e+00> : vector<128x128xf32>
    %2 = tpu.matmul %0, %1, %cst {dimension_numbers = #tpu.dot_dimension_numbers<[1], [0], [0], [1], [0, 0, 1, 1], [], []>} : vector<128x128xbf16>, vector<128x128xbf16>, vector<128x128xf32> -> vector<128x128xf32>
    %3 = vector.extract_strided_slice %2 {offsets = [0, 0], sizes = [128, 64], strides = [1, 1]} : vector<128x128xf32> to vector<128x64xf32>
    %c0_3 = arith.constant 0 : index
    %c0_4 = arith.constant 0 : index
    %4 = vector.load %arg3[%c0_3, %c0_4] : memref<1x64xf32, #tpu.memory_space<vmem>>, vector<1x64xf32>
    %5 = vector.broadcast %4 : vector<1x64xf32> to vector<128x64xf32>
    %6 = arith.addf %3, %5 : vector<128x64xf32>
    %cst_5 = arith.constant 0.000000e+00 : f32
    %7 = vector.broadcast %cst_5 : f32 to vector<128x64xf32>
    %8 = arith.maximumf %6, %7 : vector<128x64xf32>
    %9 = vector.extract_strided_slice %2 {offsets = [0, 64], sizes = [128, 64], strides = [1, 1]} : vector<128x128xf32> to vector<128x64xf32>
    %10 = arith.truncf %8 : vector<128x64xf32> to vector<128x64xbf16>
    %c0_6 = arith.constant 0 : index
    %c0_7 = arith.constant 0 : index
    %11 = vector.load %arg4[%c0_6, %c0_7] : memref<64x64xbf16, #tpu.memory_space<vmem>>, vector<64x64xbf16>
    %cst_8 = arith.constant dense<0.000000e+00> : vector<128x64xf32>
    %12 = tpu.matmul %10, %11, %cst_8 {dimension_numbers = #tpu.dot_dimension_numbers<[1], [0], [0], [1], [0, 0, 1, 1], [], []>} : vector<128x64xbf16>, vector<64x64xbf16>, vector<128x64xf32> -> vector<128x64xf32>
    %c0_9 = arith.constant 0 : index
    %c0_10 = arith.constant 0 : index
    %13 = vector.load %arg5[%c0_9, %c0_10] : memref<1x64xf32, #tpu.memory_space<vmem>>, vector<1x64xf32>
    %14 = vector.broadcast %13 : vector<1x64xf32> to vector<128x64xf32>
    %15 = arith.addf %12, %14 : vector<128x64xf32>
    %cst_11 = arith.constant 0.000000e+00 : f32
    %16 = vector.broadcast %cst_11 : f32 to vector<128x64xf32>
    %17 = arith.maximumf %15, %16 : vector<128x64xf32>
    %18 = arith.truncf %17 : vector<128x64xf32> to vector<128x64xbf16>
    %c0_12 = arith.constant 0 : index
    %c0_13 = arith.constant 0 : index
    %19 = vector.load %arg6[%c0_12, %c0_13] : memref<64x48xbf16, #tpu.memory_space<vmem>>, vector<64x48xbf16>
    %cst_14 = arith.constant dense<0.000000e+00> : vector<128x48xf32>
    %20 = tpu.matmul %18, %19, %cst_14 {dimension_numbers = #tpu.dot_dimension_numbers<[1], [0], [0], [1], [0, 0, 1, 1], [], []>} : vector<128x64xbf16>, vector<64x48xbf16>, vector<128x48xf32> -> vector<128x48xf32>
    %c0_15 = arith.constant 0 : index
    %c0_16 = arith.constant 0 : index
    %21 = vector.load %arg7[%c0_15, %c0_16] : memref<1x48xf32, #tpu.memory_space<vmem>>, vector<1x48xf32>
    %22 = vector.broadcast %21 : vector<1x48xf32> to vector<128x48xf32>
    %23 = arith.addf %20, %22 : vector<128x48xf32>
    %24 = arith.truncf %23 : vector<128x48xf32> to vector<128x48xbf16>
    %c0_17 = arith.constant 0 : index
    %c0_18 = arith.constant 0 : index
    %25 = vector.load %arg8[%c0_17, %c0_18] : memref<48x64xbf16, #tpu.memory_space<vmem>>, vector<48x64xbf16>
    %cst_19 = arith.constant dense<0.000000e+00> : vector<128x64xf32>
    %26 = tpu.matmul %24, %25, %cst_19 {dimension_numbers = #tpu.dot_dimension_numbers<[1], [0], [0], [1], [0, 0, 1, 1], [], []>} : vector<128x48xbf16>, vector<48x64xbf16>, vector<128x64xf32> -> vector<128x64xf32>
    %27 = arith.addf %26, %9 : vector<128x64xf32>
    %c0_20 = arith.constant 0 : index
    %c0_21 = arith.constant 0 : index
    %28 = vector.load %arg9[%c0_20, %c0_21] : memref<1x64xf32, #tpu.memory_space<vmem>>, vector<1x64xf32>
    %29 = vector.broadcast %28 : vector<1x64xf32> to vector<128x64xf32>
    %30 = arith.addf %27, %29 : vector<128x64xf32>
    %cst_22 = arith.constant 0.000000e+00 : f32
    %31 = vector.broadcast %cst_22 : f32 to vector<128x64xf32>
    %32 = arith.maximumf %30, %31 : vector<128x64xf32>
    %33 = arith.truncf %32 : vector<128x64xf32> to vector<128x64xbf16>
    %c0_23 = arith.constant 0 : index
    %c0_24 = arith.constant 0 : index
    %34 = vector.load %arg10[%c0_23, %c0_24] : memref<64x64xbf16, #tpu.memory_space<vmem>>, vector<64x64xbf16>
    %cst_25 = arith.constant dense<0.000000e+00> : vector<128x64xf32>
    %35 = tpu.matmul %33, %34, %cst_25 {dimension_numbers = #tpu.dot_dimension_numbers<[1], [0], [0], [1], [0, 0, 1, 1], [], []>} : vector<128x64xbf16>, vector<64x64xbf16>, vector<128x64xf32> -> vector<128x64xf32>
    %c0_26 = arith.constant 0 : index
    %c0_27 = arith.constant 0 : index
    %36 = vector.load %arg11[%c0_26, %c0_27] : memref<1x64xf32, #tpu.memory_space<vmem>>, vector<1x64xf32>
    %37 = vector.broadcast %36 : vector<1x64xf32> to vector<128x64xf32>
    %38 = arith.addf %35, %37 : vector<128x64xf32>
    %cst_28 = arith.constant 0.000000e+00 : f32
    %39 = vector.broadcast %cst_28 : f32 to vector<128x64xf32>
    %40 = arith.maximumf %38, %39 : vector<128x64xf32>
    %41 = arith.truncf %40 : vector<128x64xf32> to vector<128x64xbf16>
    %c0_29 = arith.constant 0 : index
    %c0_30 = arith.constant 0 : index
    %42 = vector.load %arg12[%c0_29, %c0_30] : memref<64x128xbf16, #tpu.memory_space<vmem>>, vector<64x128xbf16>
    %cst_31 = arith.constant dense<0.000000e+00> : vector<128x128xf32>
    %43 = tpu.matmul %41, %42, %cst_31 {dimension_numbers = #tpu.dot_dimension_numbers<[1], [0], [0], [1], [0, 0, 1, 1], [], []>} : vector<128x64xbf16>, vector<64x128xbf16>, vector<128x128xf32> -> vector<128x128xf32>
    %c0_32 = arith.constant 0 : index
    %c0_33 = arith.constant 0 : index
    %44 = vector.load %arg13[%c0_32, %c0_33] : memref<1x128xf32, #tpu.memory_space<vmem>>, vector<1x128xf32>
    %45 = vector.broadcast %44 : vector<1x128xf32> to vector<128x128xf32>
    %46 = arith.addf %43, %45 : vector<128x128xf32>
    %47 = arith.truncf %46 : vector<128x128xf32> to vector<128x128xbf16>
    %c0_34 = arith.constant 0 : index
    %c0_35 = arith.constant 0 : index
    %48 = vector.load %arg14[%c0_34, %c0_35] : memref<128x128xbf16, #tpu.memory_space<vmem>>, vector<128x128xbf16>
    tpu.vector_store %arg14[%c0_34, %c0_35], %47 {strides = array<i32>} : memref<128x128xbf16, #tpu.memory_space<vmem>>, vector<128x128xbf16>,
    return
  }
  func.func @transform_0(%arg0: i32) -> (i32, i32) {
    %c0_i32 = arith.constant 0 : i32
    %c0_i32_0 = arith.constant 0 : i32
    return %arg0, %c0_i32 : i32, i32
  }
  func.func @transform_1(%arg0: i32) -> (i32, i32) {
    %c0_i32 = arith.constant 0 : i32
    %c0_i32_0 = arith.constant 0 : i32
    %c0_i32_1 = arith.constant 0 : i32
    return %c0_i32, %c0_i32_0 : i32, i32
  }
  func.func @transform_2(%arg0: i32) -> (i32, i32) {
    %c0_i32 = arith.constant 0 : i32
    %c0_i32_0 = arith.constant 0 : i32
    %c0_i32_1 = arith.constant 0 : i32
    return %c0_i32, %c0_i32_0 : i32, i32
  }
  func.func @transform_3(%arg0: i32) -> (i32, i32) {
    %c0_i32 = arith.constant 0 : i32
    %c0_i32_0 = arith.constant 0 : i32
    %c0_i32_1 = arith.constant 0 : i32
    return %c0_i32, %c0_i32_0 : i32, i32
  }
  func.func @transform_4(%arg0: i32) -> (i32, i32) {
    %c0_i32 = arith.constant 0 : i32
    %c0_i32_0 = arith.constant 0 : i32
    %c0_i32_1 = arith.constant 0 : i32
    return %c0_i32, %c0_i32_0 : i32, i32
  }
  func.func @transform_5(%arg0: i32) -> (i32, i32) {
    %c0_i32 = arith.constant 0 : i32
    %c0_i32_0 = arith.constant 0 : i32
    %c0_i32_1 = arith.constant 0 : i32
    return %c0_i32, %c0_i32_0 : i32, i32
  }
  func.func @transform_6(%arg0: i32) -> (i32, i32) {
    %c0_i32 = arith.constant 0 : i32
    %c0_i32_0 = arith.constant 0 : i32
    %c0_i32_1 = arith.constant 0 : i32
    return %c0_i32, %c0_i32_0 : i32, i32
  }
  func.func @transform_7(%arg0: i32) -> (i32, i32) {
    %c0_i32 = arith.constant 0 : i32
    %c0_i32_0 = arith.constant 0 : i32
    %c0_i32_1 = arith.constant 0 : i32
    return %c0_i32, %c0_i32_0 : i32, i32
  }
  func.func @transform_8(%arg0: i32) -> (i32, i32) {
    %c0_i32 = arith.constant 0 : i32
    %c0_i32_0 = arith.constant 0 : i32
    %c0_i32_1 = arith.constant 0 : i32
    return %c0_i32, %c0_i32_0 : i32, i32
  }
  func.func @transform_9(%arg0: i32) -> (i32, i32) {
    %c0_i32 = arith.constant 0 : i32
    %c0_i32_0 = arith.constant 0 : i32
    %c0_i32_1 = arith.constant 0 : i32
    return %c0_i32, %c0_i32_0 : i32, i32
  }
  func.func @transform_10(%arg0: i32) -> (i32, i32) {
    %c0_i32 = arith.constant 0 : i32
    %c0_i32_0 = arith.constant 0 : i32
    %c0_i32_1 = arith.constant 0 : i32
    return %c0_i32, %c0_i32_0 : i32, i32
  }
  func.func @transform_11(%arg0: i32) -> (i32, i32) {
    %c0_i32 = arith.constant 0 : i32
    %c0_i32_0 = arith.constant 0 : i32
    %c0_i32_1 = arith.constant 0 : i32
    return %c0_i32, %c0_i32_0 : i32, i32
  }
  func.func @transform_12(%arg0: i32) -> (i32, i32) {
    %c0_i32 = arith.constant 0 : i32
    %c0_i32_0 = arith.constant 0 : i32
    %c0_i32_1 = arith.constant 0 : i32
    return %c0_i32, %c0_i32_0 : i32, i32
  }
  func.func @transform_13(%arg0: i32) -> (i32, i32) {
    %c0_i32 = arith.constant 0 : i32
    %c0_i32_0 = arith.constant 0 : i32
    return %arg0, %c0_i32 : i32, i32
  }
}

</mosaic_0001>

<llo_original>
// kernel: tpu_custom_call.1
$region0: #{tpu_custom_call.1}
  #allocation0 [shape = 'u32[]', space=smem, size = 0x4, offset = 0x4, fixed_abs, tag = 'smem constant byte address 0x4 - core index']
  #allocation1 [shape = 'u32[144,128]{1,0:T(1,128)}', space=vmem, size = 0x12000, scoped, tag = 'internal scratch']
  %s0 = inlined_call_operand.hbm [shape: bf16[256,128], index: 0, kind: input, shape index: {}]
  %s1 = inlined_call_operand.hbm [shape: bf16[128,128], index: 1, kind: input, shape index: {}]
  %s2 = inlined_call_operand.vmem [shape: f32[1,64], index: 2, kind: input, shape index: {}]
  %s3 = inlined_call_operand.vmem [shape: bf16[64,64], index: 3, kind: input, shape index: {}]
  %s4 = inlined_call_operand.hbm [shape: f32[1,64], index: 4, kind: input, shape index: {}]
  %s5 = inlined_call_operand.vmem [shape: bf16[64,48], index: 5, kind: input, shape index: {}]
  %s6 = inlined_call_operand.hbm [shape: f32[1,48], index: 6, kind: input, shape index: {}]
  %s7 = inlined_call_operand.hbm [shape: bf16[48,64], index: 7, kind: input, shape index: {}]
  %s8 = inlined_call_operand.hbm [shape: f32[1,64], index: 8, kind: input, shape index: {}]
  %s9 = inlined_call_operand.vmem [shape: bf16[64,64], index: 9, kind: input, shape index: {}]
  %s10 = inlined_call_operand.hbm [shape: f32[1,64], index: 10, kind: input, shape index: {}]
  %s11 = inlined_call_operand.vmem [shape: bf16[64,128], index: 11, kind: input, shape index: {}]
  %s12 = inlined_call_operand.vmem [shape: f32[1,128], index: 12, kind: input, shape index: {}]
  %s13 = inlined_call_operand.hbm [shape: bf16[256,128], index: 13, kind: output, shape index: {}]
  %s14 = sld [smem:[#allocation0]]
  $region113: #{tpu_custom_call.1} parent=0
    _
  %s16 = ssub.s32 1, %s14
  %s17 = scalar_select 0, %s16, %s14
  $region1: #{tpu_custom_call.1} parent=0
    #allocation2 [shape = 'u8[65536]{0}', space=vmem, size = 0x10000, scoped, tag = 'input window, operand 0']
    #allocation3 [shape = 's32[2]{0}', space=sflag, size = 0x8, scoped, tag = 'scoped memory for tpu_custom_call.1']
    #allocation4 [shape = 's32[2]{0}', space=sflag, size = 0x8, scoped, tag = 'scoped memory for tpu_custom_call.1']
    #allocation5 [shape = 'u8[32768]{0}', space=vmem, size = 0x8000, scoped, tag = 'input window, operand 1, single buffered']
    #allocation6 [shape = 's32[1]{0}', space=sflag, size = 0x4, scoped, tag = 'scoped memory for tpu_custom_call.1']
    #allocation7 [shape = 'u8[512]{0}', space=vmem, size = 0x400, scoped, tag = 'input window, operand 4, single buffered']
    #allocation8 [shape = 'u8[512]{0}', space=vmem, size = 0x400, scoped, tag = 'input window, operand 6, single buffered']
    #allocation9 [shape = 's32[1]{0}', space=sflag, size = 0x4, scoped, tag = 'scoped memory for tpu_custom_call.1']
    #allocation10 [shape = 'u8[12288]{0}', space=vmem, size = 0x3000, scoped, tag = 'input window, operand 7, single buffered']
    #allocation11 [shape = 'u8[512]{0}', space=vmem, size = 0x400, scoped, tag = 'input window, operand 8, single buffered']
    #allocation12 [shape = 's32[1]{0}', space=sflag, size = 0x4, scoped, tag = 'scoped memory for tpu_custom_call.1']
    #allocation13 [shape = 'u8[512]{0}', space=vmem, size = 0x400, scoped, tag = 'input window, operand 10, single buffered']
    #allocation14 [shape = 'u8[65536]{0}', space=vmem, size = 0x10000, scoped, tag = 'output window, operand 0']
    %18 = vsyncpa [#allocation3], 0
    %s19 = scalar_lea.sflag [#allocation3], 1
    %20 = vsyncpa %s19, 0
    %21 = vsyncpa [#allocation6], 0
    %22 = vsyncpa [#allocation9], 0
    %23 = vsyncpa [#allocation12], 0
    %24 = vsyncpa [#allocation4], 0
    %s25 = scalar_lea.sflag [#allocation4], 1
    %26 = vsyncpa %s25, 0
    loop: start=0, step=1, limit=4
    $region2: #{tpu_custom_call.1} parent=1 // loop_pre_header
      _
    $region3: #{tpu_custom_call.1} parent=1 // loop_header
      %s28 = sphi 0, %s32
      %p29 = scmp.ge.s32.totalorder %s28, 4
      %s38 = sphi 0, %s40
      %s41 = sphi 0, %s38
      %s42 = sphi 0, %s41
      %s58 = sphi 0, %s42
      %s62 = sphi 0, %s62
      %s64 = sphi 0, %s62
      %s65 = sphi 0, %s64
      %s79 = sphi 0, %s65
      %s83 = sphi 0, %s83
      %s85 = sphi 0, %s83
      %s86 = sphi 0, %s85
      %s100 = sphi 0, %s86
      %s104 = sphi 0, %s104
      %s106 = sphi 0, %s104
      %s107 = sphi 0, %s106
      %s121 = sphi 0, %s107
      %s125 = sphi 0, %s125
      %s127 = sphi 0, %s125
      %s128 = sphi 0, %s127
      %s142 = sphi 0, %s128
      %s146 = sphi 0, %s146
      %s148 = sphi 0, %s146
      %s149 = sphi 0, %s148
      %s163 = sphi 0, %s149
      %s167 = sphi 0, %s167
      %s169 = sphi 0, %s167
      %s170 = sphi 0, %s169
      %s184 = sphi 0, %s170
      %s188 = sphi 0, %s188
      %s190 = sphi 0, %s188
      %s191 = sphi 0, %s190
      %s205 = sphi 0, %s191
      %s209 = sphi 0, %s209
      %s211 = sphi 0, %s209
      %s212 = sphi 0, %s211
      %s226 = sphi 0, %s212
      %s230 = sphi 0, %s230
      %s232 = sphi 0, %s230
      %s233 = sphi 0, %s232
      %s247 = sphi 0, %s233
      %s251 = sphi 0, %s251
      %s253 = sphi 0, %s251
      %s254 = sphi 0, %s253
      %s268 = sphi 0, %s254
      %s272 = sphi 0, %s272
      %s274 = sphi 0, %s272
      %s275 = sphi 0, %s274
      %s289 = sphi 0, %s275
      %s293 = sphi 0, %s293
      %s295 = sphi 0, %s293
      %s296 = sphi 0, %s295
      %s310 = sphi 0, %s296
      %s316 = sphi 0, %s318
      %s319 = sphi 0, %s316
      %s320 = sphi 0, %s319
      %s336 = sphi 0, %s320
    $region4: #{tpu_custom_call.1} parent=1 // loop_header_branch
      %31 = sbr.rel (%p29) target = $region8
    $region5: #{tpu_custom_call.1} parent=1 // loop_body
      %s33 = ssub.s32 %s28, 1
      %s34 = ssub.s32 %s28, 2
      %s35 = sadd.s32 %s28, 1
      %s36 = ssub.s32 %s28, %s35
      %p37 = scmp.eq.s32.totalorder %s36, 0
      %s39 = sadd.s32 %s38, 1
      %s40 = scalar_select %p37, %s38, %s39
      %p43 = pneg %p37
      %p44 = scmp.eq.s32.totalorder %s28, 1
      %p45 = por %p43, %p44
      %p46 = scmp.ne.s32.totalorder %s38, %s41
      %p47 = scmp.eq.s32.totalorder %s28, 0
      %p48 = por %p46, %p47
      %p49 = scmp.ne.s32.totalorder %s38, %s41
      %p50 = scmp.eq.s32.totalorder %s33, 1
      %p51 = por %p49, %p50
      %p52 = scmp.ne.s32.totalorder %s41, %s42
      %p53 = scmp.eq.s32.totalorder %s33, 0
      %p54 = por %p52, %p53
      %p55 = scmp.ne.s32.totalorder %s41, %s42
      %p56 = scmp.eq.s32.totalorder %s34, 1
      %p57 = por %p55, %p56
      %p59 = scmp.ne.s32.totalorder %s42, %s58
      %p60 = scmp.eq.s32.totalorder %s34, 0
      %p61 = por %p59, %p60
      %s63 = sadd.s32 %s62, 1
      %p66 = scmp.eq.s32.totalorder %s28, 1
      %p67 = scmp.ne.s32.totalorder %s62, %s64
      %p68 = scmp.eq.s32.totalorder %s28, 0
      %p69 = por %p67, %p68
      %p70 = scmp.ne.s32.totalorder %s62, %s64
      %p71 = scmp.eq.s32.totalorder %s33, 1
      %p72 = por %p70, %p71
      %p73 = scmp.ne.s32.totalorder %s64, %s65
      %p74 = scmp.eq.s32.totalorder %s33, 0
      %p75 = por %p73, %p74
      %p76 = scmp.ne.s32.totalorder %s64, %s65
      %p77 = scmp.eq.s32.totalorder %s34, 1
      %p78 = por %p76, %p77
      %p80 = scmp.ne.s32.totalorder %s65, %s79
      %p81 = scmp.eq.s32.totalorder %s34, 0
      %p82 = por %p80, %p81
      %s84 = sadd.s32 %s83, 1
      %p87 = scmp.eq.s32.totalorder %s28, 1
      %p88 = scmp.ne.s32.totalorder %s83, %s85
      %p89 = scmp.eq.s32.totalorder %s28, 0
      %p90 = por %p88, %p89
      %p91 = scmp.ne.s32.totalorder %s83, %s85
      %p92 = scmp.eq.s32.totalorder %s33, 1
      %p93 = por %p91, %p92
      %p94 = scmp.ne.s32.totalorder %s85, %s86
      %p95 = scmp.eq.s32.totalorder %s33, 0
      %p96 = por %p94, %p95
      %p97 = scmp.ne.s32.totalorder %s85, %s86
      %p98 = scmp.eq.s32.totalorder %s34, 1
      %p99 = por %p97, %p98
      %p101 = scmp.ne.s32.totalorder %s86, %s100
      %p102 = scmp.eq.s32.totalorder %s34, 0
      %p103 = por %p101, %p102
      %s105 = sadd.s32 %s104, 1
      %p108 = scmp.eq.s32.totalorder %s28, 1
      %p109 = scmp.ne.s32.totalorder %s104, %s106
      %p110 = scmp.eq.s32.totalorder %s28, 0
      %p111 = por %p109, %p110
      %p112 = scmp.ne.s32.totalorder %s104, %s106
      %p113 = scmp.eq.s32.totalorder %s33, 1
      %p114 = por %p112, %p113
      %p115 = scmp.ne.s32.totalorder %s106, %s107
      %p116 = scmp.eq.s32.totalorder %s33, 0
      %p117 = por %p115, %p116
      %p118 = scmp.ne.s32.totalorder %s106, %s107
      %p119 = scmp.eq.s32.totalorder %s34, 1
      %p120 = por %p118, %p119
      %p122 = scmp.ne.s32.totalorder %s107, %s121
      %p123 = scmp.eq.s32.totalorder %s34, 0
      %p124 = por %p122, %p123
      %s126 = sadd.s32 %s125, 1
      %p129 = scmp.eq.s32.totalorder %s28, 1
      %p130 = scmp.ne.s32.totalorder %s125, %s127
      %p131 = scmp.eq.s32.totalorder %s28, 0
      %p132 = por %p130, %p131
      %p133 = scmp.ne.s32.totalorder %s125, %s127
      %p134 = scmp.eq.s32.totalorder %s33, 1
      %p135 = por %p133, %p134
      %p136 = scmp.ne.s32.totalorder %s127, %s128
      %p137 = scmp.eq.s32.totalorder %s33, 0
      %p138 = por %p136, %p137
      %p139 = scmp.ne.s32.totalorder %s127, %s128
      %p140 = scmp.eq.s32.totalorder %s34, 1
      %p141 = por %p139, %p140
      %p143 = scmp.ne.s32.totalorder %s128, %s142
      %p144 = scmp.eq.s32.totalorder %s34, 0
      %p145 = por %p143, %p144
      %s147 = sadd.s32 %s146, 1
      %p150 = scmp.eq.s32.totalorder %s28, 1
      %p151 = scmp.ne.s32.totalorder %s146, %s148
      %p152 = scmp.eq.s32.totalorder %s28, 0
      %p153 = por %p151, %p152
      %p154 = scmp.ne.s32.totalorder %s146, %s148
      %p155 = scmp.eq.s32.totalorder %s33, 1
      %p156 = por %p154, %p155
      %p157 = scmp.ne.s32.totalorder %s148, %s149
      %p158 = scmp.eq.s32.totalorder %s33, 0
      %p159 = por %p157, %p158
      %p160 = scmp.ne.s32.totalorder %s148, %s149
      %p161 = scmp.eq.s32.totalorder %s34, 1
      %p162 = por %p160, %p161
      %p164 = scmp.ne.s32.totalorder %s149, %s163
      %p165 = scmp.eq.s32.totalorder %s34, 0
      %p166 = por %p164, %p165
      %s168 = sadd.s32 %s167, 1
      %p171 = scmp.eq.s32.totalorder %s28, 1
      %p172 = scmp.ne.s32.totalorder %s167, %s169
      %p173 = scmp.eq.s32.totalorder %s28, 0
      %p174 = por %p172, %p173
      %p175 = scmp.ne.s32.totalorder %s167, %s169
      %p176 = scmp.eq.s32.totalorder %s33, 1
      %p177 = por %p175, %p176
      %p178 = scmp.ne.s32.totalorder %s169, %s170
      %p179 = scmp.eq.s32.totalorder %s33, 0
      %p180 = por %p178, %p179
      %p181 = scmp.ne.s32.totalorder %s169, %s170
      %p182 = scmp.eq.s32.totalorder %s34, 1
      %p183 = por %p181, %p182
      %p185 = scmp.ne.s32.totalorder %s170, %s184
      %p186 = scmp.eq.s32.totalorder %s34, 0
      %p187 = por %p185, %p186
      %s189 = sadd.s32 %s188, 1
      %p192 = scmp.eq.s32.totalorder %s28, 1
      %p193 = scmp.ne.s32.totalorder %s188, %s190
      %p194 = scmp.eq.s32.totalorder %s28, 0
      %p195 = por %p193, %p194
      %p196 = scmp.ne.s32.totalorder %s188, %s190
      %p197 = scmp.eq.s32.totalorder %s33, 1
      %p198 = por %p196, %p197
      %p199 = scmp.ne.s32.totalorder %s190, %s191
      %p200 = scmp.eq.s32.totalorder %s33, 0
      %p201 = por %p199, %p200
      %p202 = scmp.ne.s32.totalorder %s190, %s191
      %p203 = scmp.eq.s32.totalorder %s34, 1
      %p204 = por %p202, %p203
      %p206 = scmp.ne.s32.totalorder %s191, %s205
      %p207 = scmp.eq.s32.totalorder %s34, 0
      %p208 = por %p206, %p207
      %s210 = sadd.s32 %s209, 1
      %p213 = scmp.eq.s32.totalorder %s28, 1
      %p214 = scmp.ne.s32.totalorder %s209, %s211
      %p215 = scmp.eq.s32.totalorder %s28, 0
      %p216 = por %p214, %p215
      %p217 = scmp.ne.s32.totalorder %s209, %s211
      %p218 = scmp.eq.s32.totalorder %s33, 1
      %p219 = por %p217, %p218
      %p220 = scmp.ne.s32.totalorder %s211, %s212
      %p221 = scmp.eq.s32.totalorder %s33, 0
      %p222 = por %p220, %p221
      %p223 = scmp.ne.s32.totalorder %s211, %s212
      %p224 = scmp.eq.s32.totalorder %s34, 1
      %p225 = por %p223, %p224
      %p227 = scmp.ne.s32.totalorder %s212, %s226
      %p228 = scmp.eq.s32.totalorder %s34, 0
      %p229 = por %p227, %p228
      %s231 = sadd.s32 %s230, 1
      %p234 = scmp.eq.s32.totalorder %s28, 1
      %p235 = scmp.ne.s32.totalorder %s230, %s232
      %p236 = scmp.eq.s32.totalorder %s28, 0
      %p237 = por %p235, %p236
      %p238 = scmp.ne.s32.totalorder %s230, %s232
      %p239 = scmp.eq.s32.totalorder %s33, 1
      %p240 = por %p238, %p239
      %p241 = scmp.ne.s32.totalorder %s232, %s233
      %p242 = scmp.eq.s32.totalorder %s33, 0
      %p243 = por %p241, %p242
      %p244 = scmp.ne.s32.totalorder %s232, %s233
      %p245 = scmp.eq.s32.totalorder %s34, 1
      %p246 = por %p244, %p245
      %p248 = scmp.ne.s32.totalorder %s233, %s247
      %p249 = scmp.eq.s32.totalorder %s34, 0
      %p250 = por %p248, %p249
      %s252 = sadd.s32 %s251, 1
      %p255 = scmp.eq.s32.totalorder %s28, 1
      %p256 = scmp.ne.s32.totalorder %s251, %s253
      %p257 = scmp.eq.s32.totalorder %s28, 0
      %p258 = por %p256, %p257
      %p259 = scmp.ne.s32.totalorder %s251, %s253
      %p260 = scmp.eq.s32.totalorder %s33, 1
      %p261 = por %p259, %p260
      %p262 = scmp.ne.s32.totalorder %s253, %s254
      %p263 = scmp.eq.s32.totalorder %s33, 0
      %p264 = por %p262, %p263
      %p265 = scmp.ne.s32.totalorder %s253, %s254
      %p266 = scmp.eq.s32.totalorder %s34, 1
      %p267 = por %p265, %p266
      %p269 = scmp.ne.s32.totalorder %s254, %s268
      %p270 = scmp.eq.s32.totalorder %s34, 0
      %p271 = por %p269, %p270
      %s273 = sadd.s32 %s272, 1
      %p276 = scmp.eq.s32.totalorder %s28, 1
      %p277 = scmp.ne.s32.totalorder %s272, %s274
      %p278 = scmp.eq.s32.totalorder %s28, 0
      %p279 = por %p277, %p278
      %p280 = scmp.ne.s32.totalorder %s272, %s274
      %p281 = scmp.eq.s32.totalorder %s33, 1
      %p282 = por %p280, %p281
      %p283 = scmp.ne.s32.totalorder %s274, %s275
      %p284 = scmp.eq.s32.totalorder %s33, 0
      %p285 = por %p283, %p284
      %p286 = scmp.ne.s32.totalorder %s274, %s275
      %p287 = scmp.eq.s32.totalorder %s34, 1
      %p288 = por %p286, %p287
      %p290 = scmp.ne.s32.totalorder %s275, %s289
      %p291 = scmp.eq.s32.totalorder %s34, 0
      %p292 = por %p290, %p291
      %s294 = sadd.s32 %s293, 1
      %p297 = scmp.eq.s32.totalorder %s28, 1
      %p298 = scmp.ne.s32.totalorder %s293, %s295
      %p299 = scmp.eq.s32.totalorder %s28, 0
      %p300 = por %p298, %p299
      %p301 = scmp.ne.s32.totalorder %s293, %s295
      %p302 = scmp.eq.s32.totalorder %s33, 1
      %p303 = por %p301, %p302
      %p304 = scmp.ne.s32.totalorder %s295, %s296
      %p305 = scmp.eq.s32.totalorder %s33, 0
      %p306 = por %p304, %p305
      %p307 = scmp.ne.s32.totalorder %s295, %s296
      %p308 = scmp.eq.s32.totalorder %s34, 1
      %p309 = por %p307, %p308
      %p311 = scmp.ne.s32.totalorder %s296, %s310
      %p312 = scmp.eq.s32.totalorder %s34, 0
      %p313 = por %p311, %p312
      %s314 = ssub.s32 %s28, %s35
      %p315 = scmp.eq.s32.totalorder %s314, 0
      %s317 = sadd.s32 %s316, 1
      %s318 = scalar_select %p315, %s316, %s317
      %p321 = pneg %p315
      %p322 = scmp.eq.s32.totalorder %s28, 1
      %p323 = por %p321, %p322
      %p324 = scmp.ne.s32.totalorder %s316, %s319
      %p325 = scmp.eq.s32.totalorder %s28, 0
      %p326 = por %p324, %p325
      %p327 = scmp.ne.s32.totalorder %s316, %s319
      %p328 = scmp.eq.s32.totalorder %s33, 1
      %p329 = por %p327, %p328
      %p330 = scmp.ne.s32.totalorder %s319, %s320
      %p331 = scmp.eq.s32.totalorder %s33, 0
      %p332 = por %p330, %p331
      %p333 = scmp.ne.s32.totalorder %s319, %s320
      %p334 = scmp.eq.s32.totalorder %s34, 1
      %p335 = por %p333, %p334
      %p337 = scmp.ne.s32.totalorder %s320, %s336
      %p338 = scmp.eq.s32.totalorder %s34, 0
      %p339 = por %p337, %p338
      %p340 = scmp.le.s32.totalorder 1, %s28
      %p341 = scmp.lt.s32.totalorder %s28, 3
      %p342 = pnand %p340, %p341
      %p343 = pneg %p342
      // Predicated region
      $region9: #{tpu_custom_call.1} parent=5 // pred_check
        _
      $region10: #{tpu_custom_call.1} parent=5 // pred_check_branch
        %345 = sbr.rel (%p342) target = $region12
      $region11: #{tpu_custom_call.1} parent=5 // pred_region
        %s346 = ssub.s32 %s28, 1
        // Predicated region
        $region13: #{tpu_custom_call.1} parent=11 // pred_check
          %p347 = pneg %p75
        $region14: #{tpu_custom_call.1} parent=11 // pred_check_branch
          %349 = sbr.rel (%p347) target = $region16
        $region15: #{tpu_custom_call.1} parent=11 // pred_region
          %s351 = ssub.s32 1024, 1024
          %352 = vsyncadd [#allocation6], %s351
          %s353 = sshll.u32 [#allocation5], 4
          %s354 = int_to_ptr.vmem [resolvable:$true] %s353
          %359 = dma.hbm_to_vmem [thread:$0]  %s1, 1024, %s354, [#allocation6], 64, 64, 4
        $region16: #{tpu_custom_call.1} parent=11 // pred_fallthru
          _
        // Predicated region
        $region17: #{tpu_custom_call.1} parent=11 // pred_check
          %p360 = pneg %p96
        $region18: #{tpu_custom_call.1} parent=11 // pred_check_branch
          %362 = sbr.rel (%p360) target = $region20
        $region19: #{tpu_custom_call.1} parent=11 // pred_region
          _
        $region20: #{tpu_custom_call.1} parent=11 // pred_fallthru
          _
        // Predicated region
        $region21: #{tpu_custom_call.1} parent=11 // pred_check
          %p363 = pneg %p117
        $region22: #{tpu_custom_call.1} parent=11 // pred_check_branch
          %365 = sbr.rel (%p363) target = $region24
        $region23: #{tpu_custom_call.1} parent=11 // pred_region
          _
        $region24: #{tpu_custom_call.1} parent=11 // pred_fallthru
          _
        // Predicated region
        $region25: #{tpu_custom_call.1} parent=11 // pred_check
          %p366 = pneg %p138
        $region26: #{tpu_custom_call.1} parent=11 // pred_check_branch
          %368 = sbr.rel (%p366) target = $region28
        $region27: #{tpu_custom_call.1} parent=11 // pred_region
          %s370 = ssub.s32 16, 16
          %371 = vsyncadd [#allocation6], %s370
          %s373 = sshll.u32 [#allocation7], 4
          %s374 = int_to_ptr.vmem [resolvable:$true] %s373
          %376 = dma.hbm_to_vmem [thread:$0]  %s4, 16, %s374, [#allocation6]
        $region28: #{tpu_custom_call.1} parent=11 // pred_fallthru
          _
        // Predicated region
        $region29: #{tpu_custom_call.1} parent=11 // pred_check
          %p377 = pneg %p159
        $region30: #{tpu_custom_call.1} parent=11 // pred_check_branch
          %379 = sbr.rel (%p377) target = $region32
        $region31: #{tpu_custom_call.1} parent=11 // pred_region
          _
        $region32: #{tpu_custom_call.1} parent=11 // pred_fallthru
          _
        // Predicated region
        $region33: #{tpu_custom_call.1} parent=11 // pred_check
          %p380 = pneg %p180
        $region34: #{tpu_custom_call.1} parent=11 // pred_check_branch
          %382 = sbr.rel (%p380) target = $region36
        $region35: #{tpu_custom_call.1} parent=11 // pred_region
          %s384 = ssub.s32 16, 16
          %385 = vsyncadd [#allocation9], %s384
          %s387 = sshll.u32 [#allocation8], 4
          %s388 = int_to_ptr.vmem [resolvable:$true] %s387
          %390 = dma.hbm_to_vmem [thread:$0]  %s6, 16, %s388, [#allocation9]
        $region36: #{tpu_custom_call.1} parent=11 // pred_fallthru
          _
        // Predicated region
        $region37: #{tpu_custom_call.1} parent=11 // pred_check
          %p391 = pneg %p201
        $region38: #{tpu_custom_call.1} parent=11 // pred_check_branch
          %393 = sbr.rel (%p391) target = $region40
        $region39: #{tpu_custom_call.1} parent=11 // pred_region
          %s395 = ssub.s32 384, 384
          %396 = vsyncadd [#allocation9], %s395
          %s397 = sshll.u32 [#allocation10], 4
          %s398 = int_to_ptr.vmem [resolvable:$true] %s397
          %403 = dma.hbm_to_vmem [thread:$0]  %s7, 384, %s398, [#allocation9], 64, 64, 4
        $region40: #{tpu_custom_call.1} parent=11 // pred_fallthru
          _
        // Predicated region
        $region41: #{tpu_custom_call.1} parent=11 // pred_check
          %p404 = pneg %p222
        $region42: #{tpu_custom_call.1} parent=11 // pred_check_branch
          %406 = sbr.rel (%p404) target = $region44
        $region43: #{tpu_custom_call.1} parent=11 // pred_region
          %s408 = ssub.s32 16, 16
          %409 = vsyncadd [#allocation12], %s408
          %s411 = sshll.u32 [#allocation11], 4
          %s412 = int_to_ptr.vmem [resolvable:$true] %s411
          %414 = dma.hbm_to_vmem [thread:$0]  %s8, 16, %s412, [#allocation12]
        $region44: #{tpu_custom_call.1} parent=11 // pred_fallthru
          _
        // Predicated region
        $region45: #{tpu_custom_call.1} parent=11 // pred_check
          %p415 = pneg %p243
        $region46: #{tpu_custom_call.1} parent=11 // pred_check_branch
          %417 = sbr.rel (%p415) target = $region48
        $region47: #{tpu_custom_call.1} parent=11 // pred_region
          _
        $region48: #{tpu_custom_call.1} parent=11 // pred_fallthru
          _
        // Predicated region
        $region49: #{tpu_custom_call.1} parent=11 // pred_check
          %p418 = pneg %p264
        $region50: #{tpu_custom_call.1} parent=11 // pred_check_branch
          %420 = sbr.rel (%p418) target = $region52
        $region51: #{tpu_custom_call.1} parent=11 // pred_region
          %s422 = ssub.s32 16, 16
          %423 = vsyncadd [#allocation12], %s422
          %s425 = sshll.u32 [#allocation13], 4
          %s426 = int_to_ptr.vmem [resolvable:$true] %s425
          %428 = dma.hbm_to_vmem [thread:$0]  %s10, 16, %s426, [#allocation12]
        $region52: #{tpu_custom_call.1} parent=11 // pred_fallthru
          _
        // Predicated region
        $region53: #{tpu_custom_call.1} parent=11 // pred_check
          %p429 = pneg %p285
        $region54: #{tpu_custom_call.1} parent=11 // pred_check_branch
          %431 = sbr.rel (%p429) target = $region56
        $region55: #{tpu_custom_call.1} parent=11 // pred_region
          _
        $region56: #{tpu_custom_call.1} parent=11 // pred_fallthru
          _
        // Predicated region
        $region57: #{tpu_custom_call.1} parent=11 // pred_check
          %p432 = pneg %p306
        $region58: #{tpu_custom_call.1} parent=11 // pred_check_branch
          %434 = sbr.rel (%p432) target = $region60
        $region59: #{tpu_custom_call.1} parent=11 // pred_region
          _
        $region60: #{tpu_custom_call.1} parent=11 // pred_fallthru
          _
      $region12: #{tpu_custom_call.1} parent=5 // pred_fallthru
        _
      %p435 = scmp.lt.s32.totalorder %s28, 2
      // Predicated region
      $region61: #{tpu_custom_call.1} parent=5 // pred_check
        %p436 = pneg %p435
      $region62: #{tpu_custom_call.1} parent=5 // pred_check_branch
        %438 = sbr.rel (%p436) target = $region64
      $region63: #{tpu_custom_call.1} parent=5 // pred_region
        // Predicated region
        $region65: #{tpu_custom_call.1} parent=63 // pred_check
          %p439 = pneg %p48
        $region66: #{tpu_custom_call.1} parent=63 // pred_check_branch
          %441 = sbr.rel (%p439) target = $region68
        $region67: #{tpu_custom_call.1} parent=63 // pred_region
          %s442 = sand.u32 %s38, 1
          %s443 = scalar_lea.sflag [#allocation3], %s442
          %s444 = sand.u32 %s38, 1
          %s445 = smul.addr %s444, 64
          %s446 = scalar_lea.vmem [#allocation2], %s445
          %s447 = smul.u32 16, %s28
          %s449 = ssub.s32 1024, 1024
          %450 = vsyncadd %s443, %s449
          %s451 = smul.addr %s447, 64
          %s452 = scalar_lea.hbm %s0, %s451
          %s453 = sshll.u32 %s446, 4
          %s454 = int_to_ptr.vmem [resolvable:$true] %s453
          %459 = dma.hbm_to_vmem [thread:$0]  %s452, 1024, %s454, %s443, 64, 64, 4
        $region68: #{tpu_custom_call.1} parent=63 // pred_fallthru
          _
      $region64: #{tpu_custom_call.1} parent=5 // pred_fallthru
        _
      %p460 = scmp.le.s32.totalorder 1, %s28
      %p461 = scmp.lt.s32.totalorder %s28, 3
      %p462 = pnand %p460, %p461
      %p463 = pneg %p462
      // Predicated region
      $region69: #{tpu_custom_call.1} parent=5 // pred_check
        _
      $region70: #{tpu_custom_call.1} parent=5 // pred_check_branch
        %465 = sbr.rel (%p462) target = $region72
      $region71: #{tpu_custom_call.1} parent=5 // pred_region
        %s466 = ssub.s32 %s28, 1
        %s467 = sand.u32 %s41, 1
        %s468 = scalar_lea.sflag [#allocation3], %s467
        %s469 = sand.u32 %s41, 1
        %s470 = smul.addr %s469, 64
        %s471 = scalar_lea.vmem [#allocation2], %s470
        // Predicated region
        $region73: #{tpu_custom_call.1} parent=71 // pred_check
          %p472 = pneg %p54
        $region74: #{tpu_custom_call.1} parent=71 // pred_check_branch
          %474 = sbr.rel (%p472) target = $region76
        $region75: #{tpu_custom_call.1} parent=71 // pred_region
          %475 = dma.done %s468, 1024
        $region76: #{tpu_custom_call.1} parent=71 // pred_fallthru
          _
        // Predicated region
        $region77: #{tpu_custom_call.1} parent=71 // pred_check
          %p476 = pneg %p75
        $region78: #{tpu_custom_call.1} parent=71 // pred_check_branch
          %478 = sbr.rel (%p476) target = $region80
        $region79: #{tpu_custom_call.1} parent=71 // pred_region
          %479 = dma.done [#allocation6], 1024
        $region80: #{tpu_custom_call.1} parent=71 // pred_fallthru
          _
        // Predicated region
        $region81: #{tpu_custom_call.1} parent=71 // pred_check
          %p480 = pneg %p138
        $region82: #{tpu_custom_call.1} parent=71 // pred_check_branch
          %482 = sbr.rel (%p480) target = $region84
        $region83: #{tpu_custom_call.1} parent=71 // pred_region
          %483 = dma.done [#allocation6], 16
        $region84: #{tpu_custom_call.1} parent=71 // pred_fallthru
          _
        // Predicated region
        $region85: #{tpu_custom_call.1} parent=71 // pred_check
          %p484 = pneg %p180
        $region86: #{tpu_custom_call.1} parent=71 // pred_check_branch
          %486 = sbr.rel (%p484) target = $region88
        $region87: #{tpu_custom_call.1} parent=71 // pred_region
          %487 = dma.done [#allocation9], 16
        $region88: #{tpu_custom_call.1} parent=71 // pred_fallthru
          _
        // Predicated region
        $region89: #{tpu_custom_call.1} parent=71 // pred_check
          %p488 = pneg %p201
        $region90: #{tpu_custom_call.1} parent=71 // pred_check_branch
          %490 = sbr.rel (%p488) target = $region92
        $region91: #{tpu_custom_call.1} parent=71 // pred_region
          %491 = dma.done [#allocation9], 384
        $region92: #{tpu_custom_call.1} parent=71 // pred_fallthru
          _
        // Predicated region
        $region93: #{tpu_custom_call.1} parent=71 // pred_check
          %p492 = pneg %p222
        $region94: #{tpu_custom_call.1} parent=71 // pred_check_branch
          %494 = sbr.rel (%p492) target = $region96
        $region95: #{tpu_custom_call.1} parent=71 // pred_region
          %495 = dma.done [#allocation12], 16
        $region96: #{tpu_custom_call.1} parent=71 // pred_fallthru
          _
        // Predicated region
        $region97: #{tpu_custom_call.1} parent=71 // pred_check
          %p496 = pneg %p264
        $region98: #{tpu_custom_call.1} parent=71 // pred_check_branch
          %498 = sbr.rel (%p496) target = $region100
        $region99: #{tpu_custom_call.1} parent=71 // pred_region
          %499 = dma.done [#allocation12], 16
        $region100: #{tpu_custom_call.1} parent=71 // pred_fallthru
          _
        %s500 = sand.u32 %s41, 1
        %s501 = scalar_lea.sflag [#allocation3], %s500
        %s502 = sand.u32 %s41, 1
        %s503 = smul.addr %s502, 64
        %s504 = scalar_lea.vmem [#allocation2], %s503
        %p505 = pneg %p54
        %p506 = pneg %p51
        %p507 = pneg %p75
        %p508 = pneg %p72
        %p509 = pneg %p96
        %p510 = pneg %p93
        %p511 = pneg %p117
        %p512 = pneg %p114
        %p513 = pneg %p138
        %p514 = pneg %p135
        %p515 = pneg %p159
        %p516 = pneg %p156
        %p517 = pneg %p180
        %p518 = pneg %p177
        %p519 = pneg %p201
        %p520 = pneg %p198
        %p521 = pneg %p222
        %p522 = pneg %p219
        %p523 = pneg %p243
        %p524 = pneg %p240
        %p525 = pneg %p264
        %p526 = pneg %p261
        %p527 = pneg %p285
        %p528 = pneg %p282
        %p529 = pneg %p306
        %p530 = pneg %p303
        %p531 = pneg %p332
        %p532 = pneg %p329
        %s533 = sand.u32 %s319, 1
        %s534 = scalar_lea.sflag [#allocation4], %s533
        %s535 = sand.u32 %s319, 1
        %s536 = smul.addr %s535, 64
        %s537 = scalar_lea.vmem [#allocation14], %s536
        %s538 = smul.u32 16, %s33
        %s539 = smul.u32 16, %s33
        %v541 = vld [vmem:[%s471] sm:$0xf]
        %v542 = vld [vmem:[%s471 + $0x4] sm:$0xf]
        %v543 = vld [vmem:[%s471 + $0x8] sm:$0xf]
        %v544 = vld [vmem:[%s471 + $0xc] sm:$0xf]
        %v545 = vld [vmem:[%s471 + $0x10] sm:$0xf]
        %v546 = vld [vmem:[%s471 + $0x14] sm:$0xf]
        %v547 = vld [vmem:[%s471 + $0x18] sm:$0xf]
        %v548 = vld [vmem:[%s471 + $0x1c] sm:$0xf]
        %v549 = vld [vmem:[%s471 + $0x20] sm:$0xf]
        %v550 = vld [vmem:[%s471 + $0x24] sm:$0xf]
        %v551 = vld [vmem:[%s471 + $0x28] sm:$0xf]
        %v552 = vld [vmem:[%s471 + $0x2c] sm:$0xf]
        %v553 = vld [vmem:[%s471 + $0x30] sm:$0xf]
        %v554 = vld [vmem:[%s471 + $0x34] sm:$0xf]
        %v555 = vld [vmem:[%s471 + $0x38] sm:$0xf]
        %v556 = vld [vmem:[%s471 + $0x3c] sm:$0xf]
        %v557 = vld [vmem:[#allocation5] sm:$0xf]
        %v558 = vld [vmem:[#allocation5 + $0x4] sm:$0xf]
        %v559 = vld [vmem:[#allocation5 + $0x8] sm:$0xf]
        %v560 = vld [vmem:[#allocation5 + $0xc] sm:$0xf]
        %v561 = vld [vmem:[#allocation5 + $0x10] sm:$0xf]
        %v562 = vld [vmem:[#allocation5 + $0x14] sm:$0xf]
        %v563 = vld [vmem:[#allocation5 + $0x18] sm:$0xf]
        %v564 = vld [vmem:[#allocation5 + $0x1c] sm:$0xf]
        %v565 = vld [vmem:[#allocation5 + $0x20] sm:$0xf]
        %v566 = vld [vmem:[#allocation5 + $0x24] sm:$0xf]
        %v567 = vld [vmem:[#allocation5 + $0x28] sm:$0xf]
        %v568 = vld [vmem:[#allocation5 + $0x2c] sm:$0xf]
        %v569 = vld [vmem:[#allocation5 + $0x30] sm:$0xf]
        %v570 = vld [vmem:[#allocation5 + $0x34] sm:$0xf]
        %v571 = vld [vmem:[#allocation5 + $0x38] sm:$0xf]
        %v572 = vld [vmem:[#allocation5 + $0x3c] sm:$0xf]
        %v589 = vunpack.c.l.b16 %v541
        %v590 = vunpack.c.l.b16 %v542
        %v591 = vunpack.c.l.b16 %v543
        %v592 = vunpack.c.l.b16 %v544
        %v593 = vunpack.c.l.b16 %v545
        %v594 = vunpack.c.l.b16 %v546
        %v595 = vunpack.c.l.b16 %v547
        %v596 = vunpack.c.l.b16 %v548
        %v597 = vunpack.c.l.b16 %v549
        %v598 = vunpack.c.l.b16 %v550
        %v599 = vunpack.c.l.b16 %v551
        %v600 = vunpack.c.l.b16 %v552
        %v601 = vunpack.c.l.b16 %v553
        %v602 = vunpack.c.l.b16 %v554
        %v603 = vunpack.c.l.b16 %v555
        %v604 = vunpack.c.l.b16 %v556
        %v605 = vpack.c.b16 %v590, %v589
        %v606 = vpack.c.b16 %v592, %v591
        %v607 = vpack.c.b16 %v594, %v593
        %v608 = vpack.c.b16 %v596, %v595
        %v609 = vpack.c.b16 %v598, %v597
        %v610 = vpack.c.b16 %v600, %v599
        %v611 = vpack.c.b16 %v602, %v601
        %v612 = vpack.c.b16 %v604, %v603
        %v637 = vunpack.c.l.b16 %v557
        %v638 = vunpack.c.l.b16 %v558
        %v639 = vunpack.c.l.b16 %v559
        %v640 = vunpack.c.l.b16 %v560
        %v641 = vunpack.c.l.b16 %v561
        %v642 = vunpack.c.l.b16 %v562
        %v643 = vunpack.c.l.b16 %v563
        %v644 = vunpack.c.l.b16 %v564
        %v645 = vunpack.c.l.b16 %v565
        %v646 = vunpack.c.l.b16 %v566
        %v647 = vunpack.c.l.b16 %v567
        %v648 = vunpack.c.l.b16 %v568
        %v649 = vunpack.c.l.b16 %v569
        %v650 = vunpack.c.l.b16 %v570
        %v651 = vunpack.c.l.b16 %v571
        %v652 = vunpack.c.l.b16 %v572
        %v653 = vpack.c.b16 %v638, %v637
        %v654 = vpack.c.b16 %v640, %v639
        %v655 = vpack.c.b16 %v642, %v641
        %v656 = vpack.c.b16 %v644, %v643
        %v657 = vpack.c.b16 %v646, %v645
        %v658 = vpack.c.b16 %v648, %v647
        %v659 = vpack.c.b16 %v650, %v649
        %v660 = vpack.c.b16 %v652, %v651
        %669 = vmatprep.subr.bf16.mxu0 0
        %670 = vmatpush1.bf16.msra.mxu0 %v653
        %671 = vmatprep.subr.bf16.mxu0 0
        %672 = vmatpush1.bf16.msra.mxu0 %v654
        %673 = vmatprep.subr.bf16.mxu0 0
        %674 = vmatpush1.bf16.msra.mxu0 %v655
        %675 = vmatprep.subr.bf16.mxu0 0
        %676 = vmatpush1.bf16.msra.mxu0 %v656
        %677 = vmatprep.subr.bf16.mxu0 0
        %678 = vmatpush1.bf16.msra.mxu0 %v657
        %679 = vmatprep.subr.bf16.mxu0 0
        %680 = vmatpush1.bf16.msra.mxu0 %v658
        %681 = vmatprep.subr.bf16.mxu0 0
        %682 = vmatpush1.bf16.msra.mxu0 %v659
        %683 = vmatprep.subr.bf16.mxu0 0
        %684 = vmatpush1.bf16.msra.mxu0 %v660
        %685 = vmatprep.subr.bf16.mxu0 0
        %686 = vmatpush1.bf16.msra.mxu0 0
        %687 = vmatprep.subr.bf16.mxu0 0
        %688 = vmatpush1.bf16.msra.mxu0 0
        %689 = vmatprep.subr.bf16.mxu0 0
        %690 = vmatpush1.bf16.msra.mxu0 0
        %691 = vmatprep.subr.bf16.mxu0 0
        %692 = vmatpush1.bf16.msra.mxu0 0
        %693 = vmatprep.subr.bf16.mxu0 0
        %694 = vmatpush1.bf16.msra.mxu0 0
        %695 = vmatprep.subr.bf16.mxu0 0
        %696 = vmatpush1.bf16.msra.mxu0 0
        %697 = vmatprep.subr.bf16.mxu0 0
        %698 = vmatpush1.bf16.msra.mxu0 0
        %699 = vmatprep.subr.bf16.mxu0 0
        %700 = vmatpush1.bf16.msra.mxu0 0
        %701 = vmatprep.mubr.bf16.mxu0 0
        %702 = vmatmul.mubr.bf16.gmra.mrb[0].mxu0 %v605
        %v703 = vpop.f32.mrb[0].mxu0
        %v704 = vadd.f32 0.0, %v703
        %v705 = vpop.f32.mrb[0].mxu0
        %v706 = vpop.f32.mrb[0].mxu0
        %v707 = vadd.f32 0.0, %v706
        %v708 = vpop.f32.mrb[0].mxu0
        %709 = vmatprep.mubr.bf16.mxu0 0
        %710 = vmatmul.mubr.bf16.gmra.mrb[0].mxu0 %v606
        %v711 = vpop.f32.mrb[0].mxu0
        %v712 = vadd.f32 0.0, %v711
        %v713 = vpop.f32.mrb[0].mxu0
        %v714 = vpop.f32.mrb[0].mxu0
        %v715 = vadd.f32 0.0, %v714
        %v716 = vpop.f32.mrb[0].mxu0
        %717 = vmatprep.mubr.bf16.mxu0 0
        %718 = vmatmul.mubr.bf16.gmra.mrb[0].mxu0 %v607
        %v719 = vpop.f32.mrb[0].mxu0
        %v720 = vadd.f32 0.0, %v719
        %v721 = vpop.f32.mrb[0].mxu0
        %v722 = vpop.f32.mrb[0].mxu0
        %v723 = vadd.f32 0.0, %v722
        %v724 = vpop.f32.mrb[0].mxu0
        %725 = vmatprep.mubr.bf16.mxu0 0
        %726 = vmatmul.mubr.bf16.gmra.mrb[0].mxu0 %v608
        %v727 = vpop.f32.mrb[0].mxu0
        %v728 = vadd.f32 0.0, %v727
        %v729 = vpop.f32.mrb[0].mxu0
        %v730 = vpop.f32.mrb[0].mxu0
        %v731 = vadd.f32 0.0, %v730
        %v732 = vpop.f32.mrb[0].mxu0
        %733 = vmatprep.mubr.bf16.mxu0 0
        %734 = vmatmul.mubr.bf16.gmra.mrb[0].mxu0 %v609
        %v735 = vpop.f32.mrb[0].mxu0
        %v736 = vadd.f32 0.0, %v735
        %v737 = vpop.f32.mrb[0].mxu0
        %v738 = vpop.f32.mrb[0].mxu0
        %v739 = vadd.f32 0.0, %v738
        %v740 = vpop.f32.mrb[0].mxu0
        %741 = vmatprep.mubr.bf16.mxu0 0
        %742 = vmatmul.mubr.bf16.gmra.mrb[0].mxu0 %v610
        %v743 = vpop.f32.mrb[0].mxu0
        %v744 = vadd.f32 0.0, %v743
        %v745 = vpop.f32.mrb[0].mxu0
        %v746 = vpop.f32.mrb[0].mxu0
        %v747 = vadd.f32 0.0, %v746
        %v748 = vpop.f32.mrb[0].mxu0
        %749 = vmatprep.mubr.bf16.mxu0 0
        %750 = vmatmul.mubr.bf16.gmra.mrb[0].mxu0 %v611
        %v751 = vpop.f32.mrb[0].mxu0
        %v752 = vadd.f32 0.0, %v751
        %v753 = vpop.f32.mrb[0].mxu0
        %v754 = vpop.f32.mrb[0].mxu0
        %v755 = vadd.f32 0.0, %v754
        %v756 = vpop.f32.mrb[0].mxu0
        %757 = vmatprep.mubr.bf16.mxu0 0
        %758 = vmatmul.mubr.bf16.gmra.mrb[0].mxu0 %v612
        %v759 = vpop.f32.mrb[0].mxu0
        %v760 = vadd.f32 0.0, %v759
        %v761 = vpop.f32.mrb[0].mxu0
        %v762 = vpop.f32.mrb[0].mxu0
        %v763 = vadd.f32 0.0, %v762
        %v764 = vpop.f32.mrb[0].mxu0
        %765 = vdwg.mxu0
        %v766 = vld [vmem:[%s2] sm:$0x1]
        %v768 = vlaneseq
        %v769 = vshrl.u32 %v768, 7
        %v770 = vsub.s32 0, %v769
        %v771 = vrot.slane %v766, %v770
        %v773 = vadd.f32 %v704, %v771
        %v774 = vadd.f32 %v707, %v771
        %v775 = vadd.f32 %v712, %v771
        %v776 = vadd.f32 %v715, %v771
        %v777 = vadd.f32 %v720, %v771
        %v778 = vadd.f32 %v723, %v771
        %v779 = vadd.f32 %v728, %v771
        %v780 = vadd.f32 %v731, %v771
        %v781 = vadd.f32 %v736, %v771
        %v782 = vadd.f32 %v739, %v771
        %v783 = vadd.f32 %v744, %v771
        %v784 = vadd.f32 %v747, %v771
        %v785 = vadd.f32 %v752, %v771
        %v786 = vadd.f32 %v755, %v771
        %v787 = vadd.f32 %v760, %v771
        %v788 = vadd.f32 %v763, %v771
        %v789 = vmax.f32 %v773, 0.0
        %v790 = vmax.f32 %v774, 0.0
        %v791 = vmax.f32 %v775, 0.0
        %v792 = vmax.f32 %v776, 0.0
        %v793 = vmax.f32 %v777, 0.0
        %v794 = vmax.f32 %v778, 0.0
        %v795 = vmax.f32 %v779, 0.0
        %v796 = vmax.f32 %v780, 0.0
        %v797 = vmax.f32 %v781, 0.0
        %v798 = vmax.f32 %v782, 0.0
        %v799 = vmax.f32 %v783, 0.0
        %v800 = vmax.f32 %v784, 0.0
        %v801 = vmax.f32 %v785, 0.0
        %v802 = vmax.f32 %v786, 0.0
        %v803 = vmax.f32 %v787, 0.0
        %v804 = vmax.f32 %v788, 0.0
        %v805 = vpack.c.bf16 %v790, %v789
        %v806 = vpack.c.bf16 %v792, %v791
        %v807 = vpack.c.bf16 %v794, %v793
        %v808 = vpack.c.bf16 %v796, %v795
        %v809 = vpack.c.bf16 %v798, %v797
        %v810 = vpack.c.bf16 %v800, %v799
        %v811 = vpack.c.bf16 %v802, %v801
        %v812 = vpack.c.bf16 %v804, %v803
        %v813 = vld [vmem:[%s3] sm:$0xf]
        %v814 = vld [vmem:[%s3 + $0x4] sm:$0xf]
        %v815 = vld [vmem:[%s3 + $0x8] sm:$0xf]
        %v816 = vld [vmem:[%s3 + $0xc] sm:$0xf]
        %v817 = vld [vmem:[%s3 + $0x10] sm:$0xf]
        %v818 = vld [vmem:[%s3 + $0x14] sm:$0xf]
        %v819 = vld [vmem:[%s3 + $0x18] sm:$0xf]
        %v820 = vld [vmem:[%s3 + $0x1c] sm:$0xf]
        %v821 = vld [vmem:[#allocation7] sm:$0x1]
        %v823 = vlaneseq
        %v824 = vshrl.u32 %v823, 7
        %v825 = vsub.s32 0, %v824
        %v826 = vrot.slane %v821, %v825
        %v836 = vunpack.c.l.b16 %v813
        %v837 = vunpack.c.l.b16 %v814
        %v838 = vunpack.c.l.b16 %v815
        %v839 = vunpack.c.l.b16 %v816
        %v840 = vunpack.c.l.b16 %v817
        %v841 = vunpack.c.l.b16 %v818
        %v842 = vunpack.c.l.b16 %v819
        %v843 = vunpack.c.l.b16 %v820
        %v844 = vpack.c.b16 %v837, %v836
        %v845 = vpack.c.b16 %v839, %v838
        %v846 = vpack.c.b16 %v841, %v840
        %v847 = vpack.c.b16 %v843, %v842
        %vm852 = vcmask 523264
        %v854 = vsel %vm852, %v805, 0
        %v857 = vsel %vm852, %v806, 0
        %v860 = vsel %vm852, %v807, 0
        %v863 = vsel %vm852, %v808, 0
        %v866 = vsel %vm852, %v809, 0
        %v869 = vsel %vm852, %v810, 0
        %v872 = vsel %vm852, %v811, 0
        %v875 = vsel %vm852, %v812, 0
        %877 = vmatprep.subr.bf16.mxu0 0
        %878 = vmatpush1.bf16.msra.mxu0 %v844
        %879 = vmatprep.subr.bf16.mxu0 0
        %880 = vmatpush1.bf16.msra.mxu0 %v845
        %881 = vmatprep.subr.bf16.mxu0 0
        %882 = vmatpush1.bf16.msra.mxu0 %v846
        %883 = vmatprep.subr.bf16.mxu0 0
        %884 = vmatpush1.bf16.msra.mxu0 %v847
        %885 = vmatprep.subr.bf16.mxu0 0
        %886 = vmatpush1.bf16.msra.mxu0 0
        %887 = vmatprep.subr.bf16.mxu0 0
        %888 = vmatpush1.bf16.msra.mxu0 0
        %889 = vmatprep.subr.bf16.mxu0 0
        %890 = vmatpush1.bf16.msra.mxu0 0
        %891 = vmatprep.subr.bf16.mxu0 0
        %892 = vmatpush1.bf16.msra.mxu0 0
        %893 = vmatprep.subr.bf16.mxu0 0
        %894 = vmatpush1.bf16.msra.mxu0 0
        %895 = vmatprep.subr.bf16.mxu0 0
        %896 = vmatpush1.bf16.msra.mxu0 0
        %897 = vmatprep.subr.bf16.mxu0 0
        %898 = vmatpush1.bf16.msra.mxu0 0
        %899 = vmatprep.subr.bf16.mxu0 0
        %900 = vmatpush1.bf16.msra.mxu0 0
        %901 = vmatprep.subr.bf16.mxu0 0
        %902 = vmatpush1.bf16.msra.mxu0 0
        %903 = vmatprep.subr.bf16.mxu0 0
        %904 = vmatpush1.bf16.msra.mxu0 0
        %905 = vmatprep.subr.bf16.mxu0 0
        %906 = vmatpush1.bf16.msra.mxu0 0
        %907 = vmatprep.subr.bf16.mxu0 0
        %908 = vmatpush1.bf16.msra.mxu0 0
        %909 = vmatprep.mubr.bf16.mxu0 0
        %910 = vmatmul.mubr.bf16.gmra.mrb[0].mxu0 %v854
        %v911 = vpop.f32.mrb[0].mxu0
        %v912 = vadd.f32 %v826, %v911
        %v913 = vpop.f32.mrb[0].mxu0
        %v914 = vpop.f32.mrb[0].mxu0
        %v915 = vadd.f32 %v826, %v914
        %v916 = vpop.f32.mrb[0].mxu0
        %917 = vmatprep.mubr.bf16.mxu0 0
        %918 = vmatmul.mubr.bf16.gmra.mrb[0].mxu0 %v857
        %v919 = vpop.f32.mrb[0].mxu0
        %v920 = vadd.f32 %v826, %v919
        %v921 = vpop.f32.mrb[0].mxu0
        %v922 = vpop.f32.mrb[0].mxu0
        %v923 = vadd.f32 %v826, %v922
        %v924 = vpop.f32.mrb[0].mxu0
        %925 = vmatprep.mubr.bf16.mxu0 0
        %926 = vmatmul.mubr.bf16.gmra.mrb[0].mxu0 %v860
        %v927 = vpop.f32.mrb[0].mxu0
        %v928 = vadd.f32 %v826, %v927
        %v929 = vpop.f32.mrb[0].mxu0
        %v930 = vpop.f32.mrb[0].mxu0
        %v931 = vadd.f32 %v826, %v930
        %v932 = vpop.f32.mrb[0].mxu0
        %933 = vmatprep.mubr.bf16.mxu0 0
        %934 = vmatmul.mubr.bf16.gmra.mrb[0].mxu0 %v863
        %v935 = vpop.f32.mrb[0].mxu0
        %v936 = vadd.f32 %v826, %v935
        %v937 = vpop.f32.mrb[0].mxu0
        %v938 = vpop.f32.mrb[0].mxu0
        %v939 = vadd.f32 %v826, %v938
        %v940 = vpop.f32.mrb[0].mxu0
        %941 = vmatprep.mubr.bf16.mxu0 0
        %942 = vmatmul.mubr.bf16.gmra.mrb[0].mxu0 %v866
        %v943 = vpop.f32.mrb[0].mxu0
        %v944 = vadd.f32 %v826, %v943
        %v945 = vpop.f32.mrb[0].mxu0
        %v946 = vpop.f32.mrb[0].mxu0
        %v947 = vadd.f32 %v826, %v946
        %v948 = vpop.f32.mrb[0].mxu0
        %949 = vmatprep.mubr.bf16.mxu0 0
        %950 = vmatmul.mubr.bf16.gmra.mrb[0].mxu0 %v869
        %v951 = vpop.f32.mrb[0].mxu0
        %v952 = vadd.f32 %v826, %v951
        %v953 = vpop.f32.mrb[0].mxu0
        %v954 = vpop.f32.mrb[0].mxu0
        %v955 = vadd.f32 %v826, %v954
        %v956 = vpop.f32.mrb[0].mxu0
        %957 = vmatprep.mubr.bf16.mxu0 0
        %958 = vmatmul.mubr.bf16.gmra.mrb[0].mxu0 %v872
        %v959 = vpop.f32.mrb[0].mxu0
        %v960 = vadd.f32 %v826, %v959
        %v961 = vpop.f32.mrb[0].mxu0
        %v962 = vpop.f32.mrb[0].mxu0
        %v963 = vadd.f32 %v826, %v962
        %v964 = vpop.f32.mrb[0].mxu0
        %965 = vmatprep.mubr.bf16.mxu0 0
        %966 = vmatmul.mubr.bf16.gmra.mrb[0].mxu0 %v875
        %v967 = vpop.f32.mrb[0].mxu0
        %v968 = vadd.f32 %v826, %v967
        %v969 = vpop.f32.mrb[0].mxu0
        %v970 = vpop.f32.mrb[0].mxu0
        %v971 = vadd.f32 %v826, %v970
        %v972 = vpop.f32.mrb[0].mxu0
        %973 = vdwg.mxu0
        %v974 = vmax.f32 %v912, 0.0
        %v975 = vmax.f32 %v915, 0.0
        %v976 = vmax.f32 %v920, 0.0
        %v977 = vmax.f32 %v923, 0.0
        %v978 = vmax.f32 %v928, 0.0
        %v979 = vmax.f32 %v931, 0.0
        %v980 = vmax.f32 %v936, 0.0
        %v981 = vmax.f32 %v939, 0.0
        %v982 = vmax.f32 %v944, 0.0
        %v983 = vmax.f32 %v947, 0.0
        %v984 = vmax.f32 %v952, 0.0
        %v985 = vmax.f32 %v955, 0.0
        %v986 = vmax.f32 %v960, 0.0
        %v987 = vmax.f32 %v963, 0.0
        %v988 = vmax.f32 %v968, 0.0
        %v989 = vmax.f32 %v971, 0.0
        %v990 = vpack.c.bf16 %v975, %v974
        %v991 = vpack.c.bf16 %v977, %v976
        %v992 = vpack.c.bf16 %v979, %v978
        %v993 = vpack.c.bf16 %v981, %v980
        %v994 = vpack.c.bf16 %v983, %v982
        %v995 = vpack.c.bf16 %v985, %v984
        %v996 = vpack.c.bf16 %v987, %v986
        %v997 = vpack.c.bf16 %v989, %v988
        %v998 = vld [vmem:[%s5] sm:$0xf]
        %v999 = vld [vmem:[%s5 + $0x4] sm:$0xf]
        %v1000 = vld [vmem:[%s5 + $0x8] sm:$0xf]
        %v1001 = vld [vmem:[%s5 + $0xc] sm:$0xf]
        %v1002 = vld [vmem:[%s5 + $0x10] sm:$0xf]
        %v1003 = vld [vmem:[%s5 + $0x14] sm:$0xf]
        %v1004 = vld [vmem:[%s5 + $0x18] sm:$0xf]
        %v1005 = vld [vmem:[%s5 + $0x1c] sm:$0xf]
        %v1006 = vld [vmem:[#allocation8] sm:$0x1]
        %v1008 = vlaneseq
        %v1009 = vshrl.u32 %v1008, 7
        %v1010 = vsub.s32 0, %v1009
        %v1011 = vrot.slane %v1006, %v1010
        %v1021 = vunpack.c.l.b16 %v998
        %v1022 = vunpack.c.l.b16 %v999
        %v1023 = vunpack.c.l.b16 %v1000
        %v1024 = vunpack.c.l.b16 %v1001
        %v1025 = vunpack.c.l.b16 %v1002
        %v1026 = vunpack.c.l.b16 %v1003
        %v1027 = vunpack.c.l.b16 %v1004
        %v1028 = vunpack.c.l.b16 %v1005
        %v1029 = vpack.c.b16 %v1022, %v1021
        %v1030 = vpack.c.b16 %v1024, %v1023
        %v1031 = vpack.c.b16 %v1026, %v1025
        %v1032 = vpack.c.b16 %v1028, %v1027
        %v1038 = vsel %vm852, %v990, 0
        %v1041 = vsel %vm852, %v991, 0
        %v1044 = vsel %vm852, %v992, 0
        %v1047 = vsel %vm852, %v993, 0
        %v1050 = vsel %vm852, %v994, 0
        %v1053 = vsel %vm852, %v995, 0
        %v1056 = vsel %vm852, %v996, 0
        %v1059 = vsel %vm852, %v997, 0
        %1061 = vmatprep.subr.bf16.mxu0 0
        %1062 = vmatpush1.bf16.msra.mxu0 %v1029
        %1063 = vmatprep.subr.bf16.mxu0 0
        %1064 = vmatpush1.bf16.msra.mxu0 %v1030
        %1065 = vmatprep.subr.bf16.mxu0 0
        %1066 = vmatpush1.bf16.msra.mxu0 %v1031
        %1067 = vmatprep.subr.bf16.mxu0 0
        %1068 = vmatpush1.bf16.msra.mxu0 %v1032
        %1069 = vmatprep.subr.bf16.mxu0 0
        %1070 = vmatpush1.bf16.msra.mxu0 0
        %1071 = vmatprep.subr.bf16.mxu0 0
        %1072 = vmatpush1.bf16.msra.mxu0 0
        %1073 = vmatprep.subr.bf16.mxu0 0
        %1074 = vmatpush1.bf16.msra.mxu0 0
        %1075 = vmatprep.subr.bf16.mxu0 0
        %1076 = vmatpush1.bf16.msra.mxu0 0
        %1077 = vmatprep.subr.bf16.mxu0 0
        %1078 = vmatpush1.bf16.msra.mxu0 0
        %1079 = vmatprep.subr.bf16.mxu0 0
        %1080 = vmatpush1.bf16.msra.mxu0 0
        %1081 = vmatprep.subr.bf16.mxu0 0
        %1082 = vmatpush1.bf16.msra.mxu0 0
        %1083 = vmatprep.subr.bf16.mxu0 0
        %1084 = vmatpush1.bf16.msra.mxu0 0
        %1085 = vmatprep.subr.bf16.mxu0 0
        %1086 = vmatpush1.bf16.msra.mxu0 0
        %1087 = vmatprep.subr.bf16.mxu0 0
        %1088 = vmatpush1.bf16.msra.mxu0 0
        %1089 = vmatprep.subr.bf16.mxu0 0
        %1090 = vmatpush1.bf16.msra.mxu0 0
        %1091 = vmatprep.subr.bf16.mxu0 0
        %1092 = vmatpush1.bf16.msra.mxu0 0
        %1093 = vmatprep.mubr.bf16.mxu0 0
        %1094 = vmatmul.mubr.bf16.gmra.mrb[0].mxu0 %v1038
        %v1095 = vpop.f32.mrb[0].mxu0
        %v1096 = vadd.f32 %v1011, %v1095
        %v1097 = vpop.f32.mrb[0].mxu0
        %v1098 = vpop.f32.mrb[0].mxu0
        %v1099 = vadd.f32 %v1011, %v1098
        %v1100 = vpop.f32.mrb[0].mxu0
        %1101 = vmatprep.mubr.bf16.mxu0 0
        %1102 = vmatmul.mubr.bf16.gmra.mrb[0].mxu0 %v1041
        %v1103 = vpop.f32.mrb[0].mxu0
        %v1104 = vadd.f32 %v1011, %v1103
        %v1105 = vpop.f32.mrb[0].mxu0
        %v1106 = vpop.f32.mrb[0].mxu0
        %v1107 = vadd.f32 %v1011, %v1106
        %v1108 = vpop.f32.mrb[0].mxu0
        %1109 = vmatprep.mubr.bf16.mxu0 0
        %1110 = vmatmul.mubr.bf16.gmra.mrb[0].mxu0 %v1044
        %v1111 = vpop.f32.mrb[0].mxu0
        %v1112 = vadd.f32 %v1011, %v1111
        %v1113 = vpop.f32.mrb[0].mxu0
        %v1114 = vpop.f32.mrb[0].mxu0
        %v1115 = vadd.f32 %v1011, %v1114
        %v1116 = vpop.f32.mrb[0].mxu0
        %1117 = vmatprep.mubr.bf16.mxu0 0
        %1118 = vmatmul.mubr.bf16.gmra.mrb[0].mxu0 %v1047
        %v1119 = vpop.f32.mrb[0].mxu0
        %v1120 = vadd.f32 %v1011, %v1119
        %v1121 = vpop.f32.mrb[0].mxu0
        %v1122 = vpop.f32.mrb[0].mxu0
        %v1123 = vadd.f32 %v1011, %v1122
        %v1124 = vpop.f32.mrb[0].mxu0
        %1125 = vmatprep.mubr.bf16.mxu0 0
        %1126 = vmatmul.mubr.bf16.gmra.mrb[0].mxu0 %v1050
        %v1127 = vpop.f32.mrb[0].mxu0
        %v1128 = vadd.f32 %v1011, %v1127
        %v1129 = vpop.f32.mrb[0].mxu0
        %v1130 = vpop.f32.mrb[0].mxu0
        %v1131 = vadd.f32 %v1011, %v1130
        %v1132 = vpop.f32.mrb[0].mxu0
        %1133 = vmatprep.mubr.bf16.mxu0 0
        %1134 = vmatmul.mubr.bf16.gmra.mrb[0].mxu0 %v1053
        %v1135 = vpop.f32.mrb[0].mxu0
        %v1136 = vadd.f32 %v1011, %v1135
        %v1137 = vpop.f32.mrb[0].mxu0
        %v1138 = vpop.f32.mrb[0].mxu0
        %v1139 = vadd.f32 %v1011, %v1138
        %v1140 = vpop.f32.mrb[0].mxu0
        %1141 = vmatprep.mubr.bf16.mxu0 0
        %1142 = vmatmul.mubr.bf16.gmra.mrb[0].mxu0 %v1056
        %v1143 = vpop.f32.mrb[0].mxu0
        %v1144 = vadd.f32 %v1011, %v1143
        %v1145 = vpop.f32.mrb[0].mxu0
        %v1146 = vpop.f32.mrb[0].mxu0
        %v1147 = vadd.f32 %v1011, %v1146
        %v1148 = vpop.f32.mrb[0].mxu0
        %1149 = vmatprep.mubr.bf16.mxu0 0
        %1150 = vmatmul.mubr.bf16.gmra.mrb[0].mxu0 %v1059
        %v1151 = vpop.f32.mrb[0].mxu0
        %v1152 = vadd.f32 %v1011, %v1151
        %v1153 = vpop.f32.mrb[0].mxu0
        %v1154 = vpop.f32.mrb[0].mxu0
        %v1155 = vadd.f32 %v1011, %v1154
        %v1156 = vpop.f32.mrb[0].mxu0
        %1157 = vdwg.mxu0
        %v1158 = vpack.c.bf16 %v1099, %v1096
        %v1159 = vpack.c.bf16 %v1107, %v1104
        %v1160 = vpack.c.bf16 %v1115, %v1112
        %v1161 = vpack.c.bf16 %v1123, %v1120
        %v1162 = vpack.c.bf16 %v1131, %v1128
        %v1163 = vpack.c.bf16 %v1139, %v1136
        %v1164 = vpack.c.bf16 %v1147, %v1144
        %v1165 = vpack.c.bf16 %v1155, %v1152
        %v1166 = vld [vmem:[#allocation10] sm:$0xf]
        %v1167 = vld [vmem:[#allocation10 + $0x4] sm:$0xf]
        %v1168 = vld [vmem:[#allocation10 + $0x8] sm:$0xf]
        %v1169 = vld [vmem:[#allocation10 + $0xc] sm:$0xf]
        %v1170 = vld [vmem:[#allocation10 + $0x10] sm:$0xf]
        %v1171 = vld [vmem:[#allocation10 + $0x14] sm:$0xf]
        %v1178 = vunpack.c.l.b16 %v1166
        %v1179 = vunpack.c.l.b16 %v1167
        %v1180 = vunpack.c.l.b16 %v1168
        %v1181 = vunpack.c.l.b16 %v1169
        %v1182 = vunpack.c.l.b16 %v1170
        %v1183 = vunpack.c.l.b16 %v1171
        %v1184 = vpack.c.b16 %v1179, %v1178
        %v1185 = vpack.c.b16 %v1181, %v1180
        %v1186 = vpack.c.b16 %v1183, %v1182
        %1206 = vrot.lane.b32.xlu0 %v704, 64
        %v1207 = vpop.permute.xlu0 %1206
        %1208 = vrot.lane.b32.xlu0 %v707, 64
        %v1209 = vpop.permute.xlu0 %1208
        %1210 = vrot.lane.b32.xlu0 %v712, 64
        %v1211 = vpop.permute.xlu0 %1210
        %1212 = vrot.lane.b32.xlu0 %v715, 64
        %v1213 = vpop.permute.xlu0 %1212
        %1214 = vrot.lane.b32.xlu0 %v720, 64
        %v1215 = vpop.permute.xlu0 %1214
        %1216 = vrot.lane.b32.xlu0 %v723, 64
        %v1217 = vpop.permute.xlu0 %1216
        %1218 = vrot.lane.b32.xlu0 %v728, 64
        %v1219 = vpop.permute.xlu0 %1218
        %1220 = vrot.lane.b32.xlu0 %v731, 64
        %v1221 = vpop.permute.xlu0 %1220
        %1222 = vrot.lane.b32.xlu0 %v736, 64
        %v1223 = vpop.permute.xlu0 %1222
        %1224 = vrot.lane.b32.xlu0 %v739, 64
        %v1225 = vpop.permute.xlu0 %1224
        %1226 = vrot.lane.b32.xlu0 %v744, 64
        %v1227 = vpop.permute.xlu0 %1226
        %1228 = vrot.lane.b32.xlu0 %v747, 64
        %v1229 = vpop.permute.xlu0 %1228
        %1230 = vrot.lane.b32.xlu0 %v752, 64
        %v1231 = vpop.permute.xlu0 %1230
        %1232 = vrot.lane.b32.xlu0 %v755, 64
        %v1233 = vpop.permute.xlu0 %1232
        %1234 = vrot.lane.b32.xlu0 %v760, 64
        %v1235 = vpop.permute.xlu0 %1234
        %1236 = vrot.lane.b32.xlu0 %v763, 64
        %v1237 = vpop.permute.xlu0 %1236
        %vm1254 = vcmask 392192
        %v1256 = vsel %vm1254, %v1158, 0
        %v1259 = vsel %vm1254, %v1159, 0
        %v1262 = vsel %vm1254, %v1160, 0
        %v1265 = vsel %vm1254, %v1161, 0
        %v1268 = vsel %vm1254, %v1162, 0
        %v1271 = vsel %vm1254, %v1163, 0
        %v1274 = vsel %vm1254, %v1164, 0
        %v1277 = vsel %vm1254, %v1165, 0
        %1279 = vmatprep.subr.bf16.mxu0 0
        %1280 = vmatpush1.bf16.msra.mxu0 %v1184
        %1281 = vmatprep.subr.bf16.mxu0 0
        %1282 = vmatpush1.bf16.msra.mxu0 %v1185
        %1283 = vmatprep.subr.bf16.mxu0 0
        %1284 = vmatpush1.bf16.msra.mxu0 %v1186
        %1285 = vmatprep.subr.bf16.mxu0 0
        %1286 = vmatpush1.bf16.msra.mxu0 0
        %1287 = vmatprep.subr.bf16.mxu0 0
        %1288 = vmatpush1.bf16.msra.mxu0 0
        %1289 = vmatprep.subr.bf16.mxu0 0
        %1290 = vmatpush1.bf16.msra.mxu0 0
        %1291 = vmatprep.subr.bf16.mxu0 0
        %1292 = vmatpush1.bf16.msra.mxu0 0
        %1293 = vmatprep.subr.bf16.mxu0 0
        %1294 = vmatpush1.bf16.msra.mxu0 0
        %1295 = vmatprep.subr.bf16.mxu0 0
        %1296 = vmatpush1.bf16.msra.mxu0 0
        %1297 = vmatprep.subr.bf16.mxu0 0
        %1298 = vmatpush1.bf16.msra.mxu0 0
        %1299 = vmatprep.subr.bf16.mxu0 0
        %1300 = vmatpush1.bf16.msra.mxu0 0
        %1301 = vmatprep.subr.bf16.mxu0 0
        %1302 = vmatpush1.bf16.msra.mxu0 0
        %1303 = vmatprep.subr.bf16.mxu0 0
        %1304 = vmatpush1.bf16.msra.mxu0 0
        %1305 = vmatprep.subr.bf16.mxu0 0
        %1306 = vmatpush1.bf16.msra.mxu0 0
        %1307 = vmatprep.subr.bf16.mxu0 0
        %1308 = vmatpush1.bf16.msra.mxu0 0
        %1309 = vmatprep.subr.bf16.mxu0 0
        %1310 = vmatpush1.bf16.msra.mxu0 0
        %1311 = vmatprep.mubr.bf16.mxu0 0
        %1312 = vmatmul.mubr.bf16.gmra.mrb[0].mxu0 %v1256
        %v1313 = vpop.f32.mrb[0].mxu0
        %v1314 = vadd.f32 %v1207, %v1313
        %v1315 = vpop.f32.mrb[0].mxu0
        %v1316 = vpop.f32.mrb[0].mxu0
        %v1317 = vadd.f32 %v1209, %v1316
        %v1318 = vpop.f32.mrb[0].mxu0
        %1319 = vmatprep.mubr.bf16.mxu0 0
        %1320 = vmatmul.mubr.bf16.gmra.mrb[0].mxu0 %v1259
        %v1321 = vpop.f32.mrb[0].mxu0
        %v1322 = vadd.f32 %v1211, %v1321
        %v1323 = vpop.f32.mrb[0].mxu0
        %v1324 = vpop.f32.mrb[0].mxu0
        %v1325 = vadd.f32 %v1213, %v1324
        %v1326 = vpop.f32.mrb[0].mxu0
        %1327 = vmatprep.mubr.bf16.mxu0 0
        %1328 = vmatmul.mubr.bf16.gmra.mrb[0].mxu0 %v1262
        %v1329 = vpop.f32.mrb[0].mxu0
        %v1330 = vadd.f32 %v1215, %v1329
        %v1331 = vpop.f32.mrb[0].mxu0
        %v1332 = vpop.f32.mrb[0].mxu0
        %v1333 = vadd.f32 %v1217, %v1332
        %v1334 = vpop.f32.mrb[0].mxu0
        %1335 = vmatprep.mubr.bf16.mxu0 0
        %1336 = vmatmul.mubr.bf16.gmra.mrb[0].mxu0 %v1265
        %v1337 = vpop.f32.mrb[0].mxu0
        %v1338 = vadd.f32 %v1219, %v1337
        %v1339 = vpop.f32.mrb[0].mxu0
        %v1340 = vpop.f32.mrb[0].mxu0
        %v1341 = vadd.f32 %v1221, %v1340
        %v1342 = vpop.f32.mrb[0].mxu0
        %1343 = vmatprep.mubr.bf16.mxu0 0
        %1344 = vmatmul.mubr.bf16.gmra.mrb[0].mxu0 %v1268
        %v1345 = vpop.f32.mrb[0].mxu0
        %v1346 = vadd.f32 %v1223, %v1345
        %v1347 = vpop.f32.mrb[0].mxu0
        %v1348 = vpop.f32.mrb[0].mxu0
        %v1349 = vadd.f32 %v1225, %v1348
        %v1350 = vpop.f32.mrb[0].mxu0
        %1351 = vmatprep.mubr.bf16.mxu0 0
        %1352 = vmatmul.mubr.bf16.gmra.mrb[0].mxu0 %v1271
        %v1353 = vpop.f32.mrb[0].mxu0
        %v1354 = vadd.f32 %v1227, %v1353
        %v1355 = vpop.f32.mrb[0].mxu0
        %v1356 = vpop.f32.mrb[0].mxu0
        %v1357 = vadd.f32 %v1229, %v1356
        %v1358 = vpop.f32.mrb[0].mxu0
        %1359 = vmatprep.mubr.bf16.mxu0 0
        %1360 = vmatmul.mubr.bf16.gmra.mrb[0].mxu0 %v1274
        %v1361 = vpop.f32.mrb[0].mxu0
        %v1362 = vadd.f32 %v1231, %v1361
        %v1363 = vpop.f32.mrb[0].mxu0
        %v1364 = vpop.f32.mrb[0].mxu0
        %v1365 = vadd.f32 %v1233, %v1364
        %v1366 = vpop.f32.mrb[0].mxu0
        %1367 = vmatprep.mubr.bf16.mxu0 0
        %1368 = vmatmul.mubr.bf16.gmra.mrb[0].mxu0 %v1277
        %v1369 = vpop.f32.mrb[0].mxu0
        %v1370 = vadd.f32 %v1235, %v1369
        %v1371 = vpop.f32.mrb[0].mxu0
        %v1372 = vpop.f32.mrb[0].mxu0
        %v1373 = vadd.f32 %v1237, %v1372
        %v1374 = vpop.f32.mrb[0].mxu0
        %1375 = vdwg.mxu0
        %v1376 = vld [vmem:[#allocation11] sm:$0x1]
        %v1378 = vlaneseq
        %v1379 = vshrl.u32 %v1378, 7
        %v1380 = vsub.s32 0, %v1379
        %v1381 = vrot.slane %v1376, %v1380
        %v1383 = vadd.f32 %v1314, %v1381
        %v1384 = vadd.f32 %v1317, %v1381
        %v1385 = vadd.f32 %v1322, %v1381
        %v1386 = vadd.f32 %v1325, %v1381
        %v1387 = vadd.f32 %v1330, %v1381
        %v1388 = vadd.f32 %v1333, %v1381
        %v1389 = vadd.f32 %v1338, %v1381
        %v1390 = vadd.f32 %v1341, %v1381
        %v1391 = vadd.f32 %v1346, %v1381
        %v1392 = vadd.f32 %v1349, %v1381
        %v1393 = vadd.f32 %v1354, %v1381
        %v1394 = vadd.f32 %v1357, %v1381
        %v1395 = vadd.f32 %v1362, %v1381
        %v1396 = vadd.f32 %v1365, %v1381
        %v1397 = vadd.f32 %v1370, %v1381
        %v1398 = vadd.f32 %v1373, %v1381
        %v1399 = vmax.f32 %v1383, 0.0
        %v1400 = vmax.f32 %v1384, 0.0
        %v1401 = vmax.f32 %v1385, 0.0
        %v1402 = vmax.f32 %v1386, 0.0
        %v1403 = vmax.f32 %v1387, 0.0
        %v1404 = vmax.f32 %v1388, 0.0
        %v1405 = vmax.f32 %v1389, 0.0
        %v1406 = vmax.f32 %v1390, 0.0
        %v1407 = vmax.f32 %v1391, 0.0
        %v1408 = vmax.f32 %v1392, 0.0
        %v1409 = vmax.f32 %v1393, 0.0
        %v1410 = vmax.f32 %v1394, 0.0
        %v1411 = vmax.f32 %v1395, 0.0
        %v1412 = vmax.f32 %v1396, 0.0
        %v1413 = vmax.f32 %v1397, 0.0
        %v1414 = vmax.f32 %v1398, 0.0
        %v1415 = vpack.c.bf16 %v1400, %v1399
        %v1416 = vpack.c.bf16 %v1402, %v1401
        %v1417 = vpack.c.bf16 %v1404, %v1403
        %v1418 = vpack.c.bf16 %v1406, %v1405
        %v1419 = vpack.c.bf16 %v1408, %v1407
        %v1420 = vpack.c.bf16 %v1410, %v1409
        %v1421 = vpack.c.bf16 %v1412, %v1411
        %v1422 = vpack.c.bf16 %v1414, %v1413
        %v1423 = vld [vmem:[%s9] sm:$0xf]
        %v1424 = vld [vmem:[%s9 + $0x4] sm:$0xf]
        %v1425 = vld [vmem:[%s9 + $0x8] sm:$0xf]
        %v1426 = vld [vmem:[%s9 + $0xc] sm:$0xf]
        %v1427 = vld [vmem:[%s9 + $0x10] sm:$0xf]
        %v1428 = vld [vmem:[%s9 + $0x14] sm:$0xf]
        %v1429 = vld [vmem:[%s9 + $0x18] sm:$0xf]
        %v1430 = vld [vmem:[%s9 + $0x1c] sm:$0xf]
        %v1431 = vld [vmem:[#allocation13] sm:$0x1]
        %v1433 = vlaneseq
        %v1434 = vshrl.u32 %v1433, 7
        %v1435 = vsub.s32 0, %v1434
        %v1436 = vrot.slane %v1431, %v1435
        %v1446 = vunpack.c.l.b16 %v1423
        %v1447 = vunpack.c.l.b16 %v1424
        %v1448 = vunpack.c.l.b16 %v1425
        %v1449 = vunpack.c.l.b16 %v1426
        %v1450 = vunpack.c.l.b16 %v1427
        %v1451 = vunpack.c.l.b16 %v1428
        %v1452 = vunpack.c.l.b16 %v1429
        %v1453 = vunpack.c.l.b16 %v1430
        %v1454 = vpack.c.b16 %v1447, %v1446
        %v1455 = vpack.c.b16 %v1449, %v1448
        %v1456 = vpack.c.b16 %v1451, %v1450
        %v1457 = vpack.c.b16 %v1453, %v1452
        %v1463 = vsel %vm852, %v1415, 0
        %v1466 = vsel %vm852, %v1416, 0
        %v1469 = vsel %vm852, %v1417, 0
        %v1472 = vsel %vm852, %v1418, 0
        %v1475 = vsel %vm852, %v1419, 0
        %v1478 = vsel %vm852, %v1420, 0
        %v1481 = vsel %vm852, %v1421, 0
        %v1484 = vsel %vm852, %v1422, 0
        %1486 = vmatprep.subr.bf16.mxu0 0
        %1487 = vmatpush1.bf16.msra.mxu0 %v1454
        %1488 = vmatprep.subr.bf16.mxu0 0
        %1489 = vmatpush1.bf16.msra.mxu0 %v1455
        %1490 = vmatprep.subr.bf16.mxu0 0
        %1491 = vmatpush1.bf16.msra.mxu0 %v1456
        %1492 = vmatprep.subr.bf16.mxu0 0
        %1493 = vmatpush1.bf16.msra.mxu0 %v1457
        %1494 = vmatprep.subr.bf16.mxu0 0
        %1495 = vmatpush1.bf16.msra.mxu0 0
        %1496 = vmatprep.subr.bf16.mxu0 0
        %1497 = vmatpush1.bf16.msra.mxu0 0
        %1498 = vmatprep.subr.bf16.mxu0 0
        %1499 = vmatpush1.bf16.msra.mxu0 0
        %1500 = vmatprep.subr.bf16.mxu0 0
        %1501 = vmatpush1.bf16.msra.mxu0 0
        %1502 = vmatprep.subr.bf16.mxu0 0
        %1503 = vmatpush1.bf16.msra.mxu0 0
        %1504 = vmatprep.subr.bf16.mxu0 0
        %1505 = vmatpush1.bf16.msra.mxu0 0
        %1506 = vmatprep.subr.bf16.mxu0 0
        %1507 = vmatpush1.bf16.msra.mxu0 0
        %1508 = vmatprep.subr.bf16.mxu0 0
        %1509 = vmatpush1.bf16.msra.mxu0 0
        %1510 = vmatprep.subr.bf16.mxu0 0
        %1511 = vmatpush1.bf16.msra.mxu0 0
        %1512 = vmatprep.subr.bf16.mxu0 0
        %1513 = vmatpush1.bf16.msra.mxu0 0
        %1514 = vmatprep.subr.bf16.mxu0 0
        %1515 = vmatpush1.bf16.msra.mxu0 0
        %1516 = vmatprep.subr.bf16.mxu0 0
        %1517 = vmatpush1.bf16.msra.mxu0 0
        %1518 = vmatprep.mubr.bf16.mxu0 0
        %1519 = vmatmul.mubr.bf16.gmra.mrb[0].mxu0 %v1463
        %v1520 = vpop.f32.mrb[0].mxu0
        %v1521 = vadd.f32 %v1436, %v1520
        %v1522 = vpop.f32.mrb[0].mxu0
        %v1523 = vpop.f32.mrb[0].mxu0
        %v1524 = vadd.f32 %v1436, %v1523
        %v1525 = vpop.f32.mrb[0].mxu0
        %1526 = vmatprep.mubr.bf16.mxu0 0
        %1527 = vmatmul.mubr.bf16.gmra.mrb[0].mxu0 %v1466
        %v1528 = vpop.f32.mrb[0].mxu0
        %v1529 = vadd.f32 %v1436, %v1528
        %v1530 = vpop.f32.mrb[0].mxu0
        %v1531 = vpop.f32.mrb[0].mxu0
        %v1532 = vadd.f32 %v1436, %v1531
        %v1533 = vpop.f32.mrb[0].mxu0
        %1534 = vmatprep.mubr.bf16.mxu0 0
        %1535 = vmatmul.mubr.bf16.gmra.mrb[0].mxu0 %v1469
        %v1536 = vpop.f32.mrb[0].mxu0
        %v1537 = vadd.f32 %v1436, %v1536
        %v1538 = vpop.f32.mrb[0].mxu0
        %v1539 = vpop.f32.mrb[0].mxu0
        %v1540 = vadd.f32 %v1436, %v1539
        %v1541 = vpop.f32.mrb[0].mxu0
        %1542 = vmatprep.mubr.bf16.mxu0 0
        %1543 = vmatmul.mubr.bf16.gmra.mrb[0].mxu0 %v1472
        %v1544 = vpop.f32.mrb[0].mxu0
        %v1545 = vadd.f32 %v1436, %v1544
        %v1546 = vpop.f32.mrb[0].mxu0
        %v1547 = vpop.f32.mrb[0].mxu0
        %v1548 = vadd.f32 %v1436, %v1547
        %v1549 = vpop.f32.mrb[0].mxu0
        %1550 = vmatprep.mubr.bf16.mxu0 0
        %1551 = vmatmul.mubr.bf16.gmra.mrb[0].mxu0 %v1475
        %v1552 = vpop.f32.mrb[0].mxu0
        %v1553 = vadd.f32 %v1436, %v1552
        %v1554 = vpop.f32.mrb[0].mxu0
        %v1555 = vpop.f32.mrb[0].mxu0
        %v1556 = vadd.f32 %v1436, %v1555
        %v1557 = vpop.f32.mrb[0].mxu0
        %1558 = vmatprep.mubr.bf16.mxu0 0
        %1559 = vmatmul.mubr.bf16.gmra.mrb[0].mxu0 %v1478
        %v1560 = vpop.f32.mrb[0].mxu0
        %v1561 = vadd.f32 %v1436, %v1560
        %v1562 = vpop.f32.mrb[0].mxu0
        %v1563 = vpop.f32.mrb[0].mxu0
        %v1564 = vadd.f32 %v1436, %v1563
        %v1565 = vpop.f32.mrb[0].mxu0
        %1566 = vmatprep.mubr.bf16.mxu0 0
        %1567 = vmatmul.mubr.bf16.gmra.mrb[0].mxu0 %v1481
        %v1568 = vpop.f32.mrb[0].mxu0
        %v1569 = vadd.f32 %v1436, %v1568
        %v1570 = vpop.f32.mrb[0].mxu0
        %v1571 = vpop.f32.mrb[0].mxu0
        %v1572 = vadd.f32 %v1436, %v1571
        %v1573 = vpop.f32.mrb[0].mxu0
        %1574 = vmatprep.mubr.bf16.mxu0 0
        %1575 = vmatmul.mubr.bf16.gmra.mrb[0].mxu0 %v1484
        %v1576 = vpop.f32.mrb[0].mxu0
        %v1577 = vadd.f32 %v1436, %v1576
        %v1578 = vpop.f32.mrb[0].mxu0
        %v1579 = vpop.f32.mrb[0].mxu0
        %v1580 = vadd.f32 %v1436, %v1579
        %v1581 = vpop.f32.mrb[0].mxu0
        %1582 = vdwg.mxu0
        %v1583 = vmax.f32 %v1521, 0.0
        %v1584 = vmax.f32 %v1524, 0.0
        %v1585 = vmax.f32 %v1529, 0.0
        %v1586 = vmax.f32 %v1532, 0.0
        %v1587 = vmax.f32 %v1537, 0.0
        %v1588 = vmax.f32 %v1540, 0.0
        %v1589 = vmax.f32 %v1545, 0.0
        %v1590 = vmax.f32 %v1548, 0.0
        %v1591 = vmax.f32 %v1553, 0.0
        %v1592 = vmax.f32 %v1556, 0.0
        %v1593 = vmax.f32 %v1561, 0.0
        %v1594 = vmax.f32 %v1564, 0.0
        %v1595 = vmax.f32 %v1569, 0.0
        %v1596 = vmax.f32 %v1572, 0.0
        %v1597 = vmax.f32 %v1577, 0.0
        %v1598 = vmax.f32 %v1580, 0.0
        %v1599 = vpack.c.bf16 %v1584, %v1583
        %v1600 = vpack.c.bf16 %v1586, %v1585
        %v1601 = vpack.c.bf16 %v1588, %v1587
        %v1602 = vpack.c.bf16 %v1590, %v1589
        %v1603 = vpack.c.bf16 %v1592, %v1591
        %v1604 = vpack.c.bf16 %v1594, %v1593
        %v1605 = vpack.c.bf16 %v1596, %v1595
        %v1606 = vpack.c.bf16 %v1598, %v1597
        %v1607 = vld [vmem:[%s11] sm:$0xf]
        %v1608 = vld [vmem:[%s11 + $0x4] sm:$0xf]
        %v1609 = vld [vmem:[%s11 + $0x8] sm:$0xf]
        %v1610 = vld [vmem:[%s11 + $0xc] sm:$0xf]
        %v1611 = vld [vmem:[%s11 + $0x10] sm:$0xf]
        %v1612 = vld [vmem:[%s11 + $0x14] sm:$0xf]
        %v1613 = vld [vmem:[%s11 + $0x18] sm:$0xf]
        %v1614 = vld [vmem:[%s11 + $0x1c] sm:$0xf]
        %v1615 = vld [vmem:[%s12] sm:$0x1]
        %v1617 = vlaneseq
        %v1618 = vshrl.u32 %v1617, 7
        %v1619 = vsub.s32 0, %v1618
        %v1620 = vrot.slane %v1615, %v1619
        %v1630 = vunpack.c.l.b16 %v1607
        %v1631 = vunpack.c.l.b16 %v1608
        %v1632 = vunpack.c.l.b16 %v1609
        %v1633 = vunpack.c.l.b16 %v1610
        %v1634 = vunpack.c.l.b16 %v1611
        %v1635 = vunpack.c.l.b16 %v1612
        %v1636 = vunpack.c.l.b16 %v1613
        %v1637 = vunpack.c.l.b16 %v1614
        %v1638 = vpack.c.b16 %v1631, %v1630
        %v1639 = vpack.c.b16 %v1633, %v1632
        %v1640 = vpack.c.b16 %v1635, %v1634
        %v1641 = vpack.c.b16 %v1637, %v1636
        %v1647 = vsel %vm852, %v1599, 0
        %v1650 = vsel %vm852, %v1600, 0
        %v1653 = vsel %vm852, %v1601, 0
        %v1656 = vsel %vm852, %v1602, 0
        %v1659 = vsel %vm852, %v1603, 0
        %v1662 = vsel %vm852, %v1604, 0
        %v1665 = vsel %vm852, %v1605, 0
        %v1668 = vsel %vm852, %v1606, 0
        %1670 = vmatprep.subr.bf16.mxu0 0
        %1671 = vmatpush1.bf16.msra.mxu0 %v1638
        %1672 = vmatprep.subr.bf16.mxu0 0
        %1673 = vmatpush1.bf16.msra.mxu0 %v1639
        %1674 = vmatprep.subr.bf16.mxu0 0
        %1675 = vmatpush1.bf16.msra.mxu0 %v1640
        %1676 = vmatprep.subr.bf16.mxu0 0
        %1677 = vmatpush1.bf16.msra.mxu0 %v1641
        %1678 = vmatprep.subr.bf16.mxu0 0
        %1679 = vmatpush1.bf16.msra.mxu0 0
        %1680 = vmatprep.subr.bf16.mxu0 0
        %1681 = vmatpush1.bf16.msra.mxu0 0
        %1682 = vmatprep.subr.bf16.mxu0 0
        %1683 = vmatpush1.bf16.msra.mxu0 0
        %1684 = vmatprep.subr.bf16.mxu0 0
        %1685 = vmatpush1.bf16.msra.mxu0 0
        %1686 = vmatprep.subr.bf16.mxu0 0
        %1687 = vmatpush1.bf16.msra.mxu0 0
        %1688 = vmatprep.subr.bf16.mxu0 0
        %1689 = vmatpush1.bf16.msra.mxu0 0
        %1690 = vmatprep.subr.bf16.mxu0 0
        %1691 = vmatpush1.bf16.msra.mxu0 0
        %1692 = vmatprep.subr.bf16.mxu0 0
        %1693 = vmatpush1.bf16.msra.mxu0 0
        %1694 = vmatprep.subr.bf16.mxu0 0
        %1695 = vmatpush1.bf16.msra.mxu0 0
        %1696 = vmatprep.subr.bf16.mxu0 0
        %1697 = vmatpush1.bf16.msra.mxu0 0
        %1698 = vmatprep.subr.bf16.mxu0 0
        %1699 = vmatpush1.bf16.msra.mxu0 0
        %1700 = vmatprep.subr.bf16.mxu0 0
        %1701 = vmatpush1.bf16.msra.mxu0 0
        %1702 = vmatprep.mubr.bf16.mxu0 0
        %1703 = vmatmul.mubr.bf16.gmra.mrb[0].mxu0 %v1647
        %v1704 = vpop.f32.mrb[0].mxu0
        %v1705 = vadd.f32 %v1620, %v1704
        %v1706 = vpop.f32.mrb[0].mxu0
        %v1707 = vpop.f32.mrb[0].mxu0
        %v1708 = vadd.f32 %v1620, %v1707
        %v1709 = vpop.f32.mrb[0].mxu0
        %1710 = vmatprep.mubr.bf16.mxu0 0
        %1711 = vmatmul.mubr.bf16.gmra.mrb[0].mxu0 %v1650
        %v1712 = vpop.f32.mrb[0].mxu0
        %v1713 = vadd.f32 %v1620, %v1712
        %v1714 = vpop.f32.mrb[0].mxu0
        %v1715 = vpop.f32.mrb[0].mxu0
        %v1716 = vadd.f32 %v1620, %v1715
        %v1717 = vpop.f32.mrb[0].mxu0
        %1718 = vmatprep.mubr.bf16.mxu0 0
        %1719 = vmatmul.mubr.bf16.gmra.mrb[0].mxu0 %v1653
        %v1720 = vpop.f32.mrb[0].mxu0
        %v1721 = vadd.f32 %v1620, %v1720
        %v1722 = vpop.f32.mrb[0].mxu0
        %v1723 = vpop.f32.mrb[0].mxu0
        %v1724 = vadd.f32 %v1620, %v1723
        %v1725 = vpop.f32.mrb[0].mxu0
        %1726 = vmatprep.mubr.bf16.mxu0 0
        %1727 = vmatmul.mubr.bf16.gmra.mrb[0].mxu0 %v1656
        %v1728 = vpop.f32.mrb[0].mxu0
        %v1729 = vadd.f32 %v1620, %v1728
        %v1730 = vpop.f32.mrb[0].mxu0
        %v1731 = vpop.f32.mrb[0].mxu0
        %v1732 = vadd.f32 %v1620, %v1731
        %v1733 = vpop.f32.mrb[0].mxu0
        %1734 = vmatprep.mubr.bf16.mxu0 0
        %1735 = vmatmul.mubr.bf16.gmra.mrb[0].mxu0 %v1659
        %v1736 = vpop.f32.mrb[0].mxu0
        %v1737 = vadd.f32 %v1620, %v1736
        %v1738 = vpop.f32.mrb[0].mxu0
        %v1739 = vpop.f32.mrb[0].mxu0
        %v1740 = vadd.f32 %v1620, %v1739
        %v1741 = vpop.f32.mrb[0].mxu0
        %1742 = vmatprep.mubr.bf16.mxu0 0
        %1743 = vmatmul.mubr.bf16.gmra.mrb[0].mxu0 %v1662
        %v1744 = vpop.f32.mrb[0].mxu0
        %v1745 = vadd.f32 %v1620, %v1744
        %v1746 = vpop.f32.mrb[0].mxu0
        %v1747 = vpop.f32.mrb[0].mxu0
        %v1748 = vadd.f32 %v1620, %v1747
        %v1749 = vpop.f32.mrb[0].mxu0
        %1750 = vmatprep.mubr.bf16.mxu0 0
        %1751 = vmatmul.mubr.bf16.gmra.mrb[0].mxu0 %v1665
        %v1752 = vpop.f32.mrb[0].mxu0
        %v1753 = vadd.f32 %v1620, %v1752
        %v1754 = vpop.f32.mrb[0].mxu0
        %v1755 = vpop.f32.mrb[0].mxu0
        %v1756 = vadd.f32 %v1620, %v1755
        %v1757 = vpop.f32.mrb[0].mxu0
        %1758 = vmatprep.mubr.bf16.mxu0 0
        %1759 = vmatmul.mubr.bf16.gmra.mrb[0].mxu0 %v1668
        %v1760 = vpop.f32.mrb[0].mxu0
        %v1761 = vadd.f32 %v1620, %v1760
        %v1762 = vpop.f32.mrb[0].mxu0
        %v1763 = vpop.f32.mrb[0].mxu0
        %v1764 = vadd.f32 %v1620, %v1763
        %v1765 = vpop.f32.mrb[0].mxu0
        %1766 = vdwg.mxu0
        %v1767 = vpack.c.bf16 %v1708, %v1705
        %v1768 = vpack.c.bf16 %v1716, %v1713
        %v1769 = vpack.c.bf16 %v1724, %v1721
        %v1770 = vpack.c.bf16 %v1732, %v1729
        %v1771 = vpack.c.bf16 %v1740, %v1737
        %v1772 = vpack.c.bf16 %v1748, %v1745
        %v1773 = vpack.c.bf16 %v1756, %v1753
        %v1774 = vpack.c.bf16 %v1764, %v1761
        %v1783 = vunpack.c.l.b16 %v1767
        %v1784 = vunpack.c.h.b16 %v1767
        %v1785 = vunpack.c.l.b16 %v1768
        %v1786 = vunpack.c.h.b16 %v1768
        %v1787 = vunpack.c.l.b16 %v1769
        %v1788 = vunpack.c.h.b16 %v1769
        %v1789 = vunpack.c.l.b16 %v1770
        %v1790 = vunpack.c.h.b16 %v1770
        %v1791 = vunpack.c.l.b16 %v1771
        %v1792 = vunpack.c.h.b16 %v1771
        %v1793 = vunpack.c.l.b16 %v1772
        %v1794 = vunpack.c.h.b16 %v1772
        %v1795 = vunpack.c.l.b16 %v1773
        %v1796 = vunpack.c.h.b16 %v1773
        %v1797 = vunpack.c.l.b16 %v1774
        %v1798 = vunpack.c.h.b16 %v1774
        %v1799 = vpack.c.b16 %v1783, %v1783
        %v1800 = vpack.c.b16 %v1784, %v1784
        %v1801 = vpack.c.b16 %v1785, %v1785
        %v1802 = vpack.c.b16 %v1786, %v1786
        %v1803 = vpack.c.b16 %v1787, %v1787
        %v1804 = vpack.c.b16 %v1788, %v1788
        %v1805 = vpack.c.b16 %v1789, %v1789
        %v1806 = vpack.c.b16 %v1790, %v1790
        %v1807 = vpack.c.b16 %v1791, %v1791
        %v1808 = vpack.c.b16 %v1792, %v1792
        %v1809 = vpack.c.b16 %v1793, %v1793
        %v1810 = vpack.c.b16 %v1794, %v1794
        %v1811 = vpack.c.b16 %v1795, %v1795
        %v1812 = vpack.c.b16 %v1796, %v1796
        %v1813 = vpack.c.b16 %v1797, %v1797
        %v1814 = vpack.c.b16 %v1798, %v1798
        %1831 = vst [vmem:[%s537] sm:$0xf] %v1799
        %1832 = vst [vmem:[%s537 + $0x4] sm:$0xf] %v1800
        %1833 = vst [vmem:[%s537 + $0x8] sm:$0xf] %v1801
        %1834 = vst [vmem:[%s537 + $0xc] sm:$0xf] %v1802
        %1835 = vst [vmem:[%s537 + $0x10] sm:$0xf] %v1803
        %1836 = vst [vmem:[%s537 + $0x14] sm:$0xf] %v1804
        %1837 = vst [vmem:[%s537 + $0x18] sm:$0xf] %v1805
        %1838 = vst [vmem:[%s537 + $0x1c] sm:$0xf] %v1806
        %1839 = vst [vmem:[%s537 + $0x20] sm:$0xf] %v1807
        %1840 = vst [vmem:[%s537 + $0x24] sm:$0xf] %v1808
        %1841 = vst [vmem:[%s537 + $0x28] sm:$0xf] %v1809
        %1842 = vst [vmem:[%s537 + $0x2c] sm:$0xf] %v1810
        %1843 = vst [vmem:[%s537 + $0x30] sm:$0xf] %v1811
        %1844 = vst [vmem:[%s537 + $0x34] sm:$0xf] %v1812
        %1845 = vst [vmem:[%s537 + $0x38] sm:$0xf] %v1813
        %1846 = vst [vmem:[%s537 + $0x3c] sm:$0xf] %v1814
        %s1847 = sand.u32 %s319, 1
        %s1848 = scalar_lea.sflag [#allocation4], %s1847
        %s1849 = sand.u32 %s319, 1
        %s1850 = smul.addr %s1849, 64
        %s1851 = scalar_lea.vmem [#allocation14], %s1850
        // Predicated region
        $region101: #{tpu_custom_call.1} parent=71 // pred_check
          %p1852 = pneg %p329
        $region102: #{tpu_custom_call.1} parent=71 // pred_check_branch
          %1854 = sbr.rel (%p1852) target = $region104
        $region103: #{tpu_custom_call.1} parent=71 // pred_region
          %s1855 = smul.u32 16, %s33
          %s1857 = ssub.s32 1024, 1024
          %1858 = vsyncadd %s1848, %s1857
          %s1859 = smul.addr %s1855, 64
          %s1860 = scalar_lea.hbm %s13, %s1859
          %s1861 = sshll.u32 %s1851, 4
          %s1862 = int_to_ptr.vmem [resolvable:$true] %s1861
          %1867 = dma.vmem_to_hbm [thread:$0]  %s1862, 1024, %s1860, %s1848, 64, 64, 4
        $region104: #{tpu_custom_call.1} parent=71 // pred_fallthru
          _
      $region72: #{tpu_custom_call.1} parent=5 // pred_fallthru
        _
      %p1868 = scmp.le.s32.totalorder 2, %s28
      // Predicated region
      $region105: #{tpu_custom_call.1} parent=5 // pred_check
        %p1869 = pneg %p1868
      $region106: #{tpu_custom_call.1} parent=5 // pred_check_branch
        %1871 = sbr.rel (%p1869) target = $region108
      $region107: #{tpu_custom_call.1} parent=5 // pred_region
        %s1872 = ssub.s32 %s28, 2
        // Predicated region
        $region109: #{tpu_custom_call.1} parent=107 // pred_check
          %p1873 = pneg %p335
        $region110: #{tpu_custom_call.1} parent=107 // pred_check_branch
          %1875 = sbr.rel (%p1873) target = $region112
        $region111: #{tpu_custom_call.1} parent=107 // pred_region
          %s1876 = sand.u32 %s320, 1
          %s1877 = scalar_lea.sflag [#allocation4], %s1876
          %s1878 = sand.u32 %s320, 1
          %s1879 = smul.addr %s1878, 64
          %s1880 = scalar_lea.vmem [#allocation14], %s1879
          %1881 = dma.done %s1877, 1024
        $region112: #{tpu_custom_call.1} parent=107 // pred_fallthru
          _
      $region108: #{tpu_custom_call.1} parent=5 // pred_fallthru
        _
    $region6: #{tpu_custom_call.1} parent=1 // loop_footer
      %s32 = sadd.s32 1, %s28
    $region7: #{tpu_custom_call.1} parent=1 // loop_footer_branch
      %27 = sbr.rel target = $region3
    $region8: #{tpu_custom_call.1} parent=1 // loop_exit
      _
    %1882 = vsyncpa [#allocation3], 1
    %s1883 = scalar_lea.sflag [#allocation3], 1
    %1884 = vsyncpa %s1883, 1
    %1885 = vsyncpa [#allocation6], 1
    %1886 = vsyncpa [#allocation9], 1
    %1887 = vsyncpa [#allocation12], 1
    %1888 = vsyncpa [#allocation4], 1
    %s1889 = scalar_lea.sflag [#allocation4], 1
    %1890 = vsyncpa %s1889, 1

</llo_original>
